<compile_context>
chip_gen: v5e
topology: v5e:2x2
jax: 0.10.0
libtpu: 0.0.40
codegen_flags: <defaults>
</compile_context>

<pallas_src>
import jax
import jax.numpy as jnp
from jax.experimental import pallas as pl
from jax.experimental.pallas import tpu as pltpu

FEATURE_PYRAMIDS = [64, 192, 448, 960]   # concat(feat_a, feat_b) channel counts
LEAKY_SLOPE = 0.2


def _leaky(x):
    # slope < 1 so max(x, 0.2*x) == LeakyReLU(x); 2 VPU ops.
    return jnp.maximum(x, LEAKY_SLOPE * x)


# ------------------------------ fused kernel -------------------------------

def _make_fused_flow_kernel(C0, F, HW, W, num_convs):
    """One grid step == one batch element == the whole FlowEstimator forward.

    refs (batch dim squeezed by the BlockSpec):
      x_ref (C0, HW) bf16        -- concat(feat_a, feat_b), channels-major
      m_ref (9, HW)  f32         -- per-tap spatial validity masks (0/1)
      then per layer: weight, bias
        3x3 layers : w (9*F,  Cin) bf16 (tap-major rows), bias (F, 1)    f32
        1x1 layers : w (Cout, Cin) bf16,                  bias (Cout, 1) f32
      o_ref (2, HW) f32          -- lane-dense output
    """
    n_layers = num_convs + 2

    def kernel(*refs):
        x_ref, m_ref = refs[0], refs[1]
        wb = refs[2:2 + 2 * n_layers]
        o_ref = refs[2 + 2 * n_layers]

        act = x_ref[...]                                  # (Cin, HW) bf16

        # ---- 3x3 convs: one big matmul, then 9 cheap rolls of (F, HW) ----
        for i in range(num_convs):
            w_ref, b_ref = wb[2 * i], wb[2 * i + 1]
            # (9F, Cin) x (Cin, HW) -> (9F, HW) f32 on the MXU.
            q = jnp.dot(w_ref[...], act, preferred_element_type=jnp.float32)
            acc = q[4 * F:5 * F, :]                       # center tap: no shift
            for k in range(9):
                if k == 4:
                    continue
                dy, dx = k // 3 - 1, k % 3 - 1
                s = dy * W + dx                           # flat spatial shift
                shifted = pltpu.roll(q[k * F:(k + 1) * F, :],
                                     (-s) % HW, axis=1)   # result[p] = q[p+s]
                acc = acc + shifted * m_ref[k:k + 1, :]   # zero 'same' halo
            act = _leaky(acc + b_ref[...]).astype(jnp.bfloat16)

        # ---- 1x1 conv -> F//2 with LeakyReLU (stays in VMEM/vregs) ----
        w3, b3 = wb[2 * num_convs], wb[2 * num_convs + 1]
        act = _leaky(jnp.dot(w3[...], act, preferred_element_type=jnp.float32)
                     + b3[...]).astype(jnp.bfloat16)

        # ---- final 1x1 conv -> 2 channels, no activation ----
        w4, b4 = wb[2 * num_convs + 2], wb[2 * num_convs + 3]
        o_ref[...] = (jnp.dot(w4[...], act, preferred_element_type=jnp.float32)
                      + b4[...])                          # (2, HW) lane-dense
    return kernel


# --------------------------------- wrapper ---------------------------------

def flow_estimator_forward(layers, features_a, features_b):
    """features_a/b: (N, C, H, W) f32 like the PyTorch module.
    Returns flow (N, 2, H, W) f32."""
    N, Ca, H, W = features_a.shape
    Cb = features_b.shape[1]
    C0 = Ca + Cb
    HW = H * W
    num_convs = sum(1 for l in layers if l['w'].ndim == 4)
    F = layers[0]['w'].shape[-1]

    # Channels-major input: NCHW already is (C, H*W) per image after reshape.
    # The a/b concat is one aligned XLA copy; cast once to bf16 (MXU operand).
    x = jnp.concatenate([features_a, features_b], axis=1)
    x = x.reshape(N, C0, HW).astype(jnp.bfloat16)

    # Per-tap spatial validity masks for 'same' zero padding (host-side: no
    # in-kernel integer div/mod).  Row k corresponds to tap (dy, dx).
    yy, xx = jnp.meshgrid(jnp.arange(H), jnp.arange(W), indexing="ij")
    mrows = []
    for dy in (-1, 0, 1):
        for dx in (-1, 0, 1):
            valid = ((yy + dy >= 0) & (yy + dy < H) &
                     (xx + dx >= 0) & (xx + dx < W))
            mrows.append(valid.reshape(HW))
    masks = jnp.stack(mrows).astype(jnp.float32)          # (9, HW)

    inputs = [x, masks]
    in_specs = [pl.BlockSpec((None, C0, HW), lambda n: (n, 0, 0)),
                pl.BlockSpec((9, HW), lambda n: (0, 0))]
    for layer in layers:
        w = layer['w']
        if w.ndim == 4:
            # 3x3 HWIO (3,3,Cin,Cout) -> tap-major (9*Cout, Cin) bf16:
            # rows [k*Cout:(k+1)*Cout] hold tap k = (dy+1)*3 + (dx+1).
            cin, cout = w.shape[2], w.shape[3]
            wp = jnp.transpose(w, (0, 1, 3, 2)).reshape(9 * cout, cin)
            wp = wp.astype(jnp.bfloat16)
        else:
            # 1x1 (Cin, Cout) -> (Cout, Cin) bf16.
            wp = w.T.astype(jnp.bfloat16)
        bp = layer['b'].reshape(-1, 1).astype(jnp.float32)   # (Cout, 1)
        inputs += [wp, bp]
        in_specs += [pl.BlockSpec(wp.shape, lambda n: (0, 0)),
                     pl.BlockSpec(bp.shape, lambda n: (0, 0))]

    out = pl.pallas_call(
        _make_fused_flow_kernel(C0, F, HW, W, num_convs),
        out_shape=jax.ShapeDtypeStruct((N, 2, HW), jnp.float32),
        grid=(N,),                        # batch on the grid, one image/step
        in_specs=in_specs,
        out_specs=pl.BlockSpec((None, 2, HW), lambda n: (n, 0, 0)),
        compiler_params=pltpu.CompilerParams(
            dimension_semantics=("parallel",)),   # shard batch over 2 TCs
    )(*inputs)
    # (N, 2, H*W) -> NCHW (N, 2, H, W): pure reshape, no transpose.
    return out.reshape(N, 2, H, W)


# --------------------------- params & pure-JAX ref ---------------------------

def init_flow_estimator(key, num_convs, feature_levels, num_filters):
    """Synthetic weights matching FlowEstimator.__init__ shapes (HWIO layout)."""
    keys = jax.random.split(key, 2 * (num_convs + 2))
    it = iter(keys)
    layers = []
    c_in = FEATURE_PYRAMIDS[feature_levels]
    for _ in range(num_convs):                                   # 3x3 convs
        w = 0.05 * jax.random.normal(next(it), (3, 3, c_in, num_filters), jnp.float32)
        b = 0.01 * jax.random.normal(next(it), (num_filters,), jnp.float32)
        layers.append({'w': w, 'b': b})
        c_in = num_filters
    w = 0.05 * jax.random.normal(next(it), (num_filters, num_filters // 2), jnp.float32)
    b = 0.01 * jax.random.normal(next(it), (num_filters // 2,), jnp.float32)
    layers.append({'w': w, 'b': b})                              # 1x1 -> nf/2
    w = 0.05 * jax.random.normal(next(it), (num_filters // 2, 2), jnp.float32)
    b = 0.01 * jax.random.normal(next(it), (2,), jnp.float32)
    layers.append({'w': w, 'b': b})                              # 1x1 -> 2
    return layers


def flow_estimator_reference(layers, features_a, features_b):
    """Pure-JAX (lax.conv, f32) reference of the same forward; NCHW in/out."""
    x = jnp.transpose(jnp.concatenate([features_a, features_b], axis=1),
                      (0, 2, 3, 1))                              # NHWC
    for i, layer in enumerate(layers):
        w = layer['w'] if layer['w'].ndim == 4 else layer['w'][None, None]
        x = jax.lax.conv_general_dilated(
            x, w, (1, 1), 'SAME',
            dimension_numbers=('NHWC', 'HWIO', 'NHWC')) + layer['b']
        if i < len(layers) - 1:
            x = _leaky(x)
    return jnp.transpose(x, (0, 3, 1, 2))                        # NCHW


# ----------------------------------- main -----------------------------------

if __name__ == "__main__":
    root = jax.random.PRNGKey(0)
    # (num_convs, feature_levels, num_filters, N, H, W) -- mirrors typical
    # PyramidFlowEstimator configs at small spatial sizes.
    configs = [
        (2, 0, 16, 2, 16, 16),
        (3, 1, 32, 2, 16, 16),
    ]
    keys = jax.random.split(root, len(configs))

    fwd = jax.jit(flow_estimator_forward)
    ref = jax.jit(flow_estimator_reference)

    for (num_convs, lvl, nf, N, H, W), kc in zip(configs, keys):
        kp, ka, kb = jax.random.split(kc, 3)
        layers = init_flow_estimator(kp, num_convs, lvl, nf)
        c_half = FEATURE_PYRAMIDS[lvl] // 2                     # per-feature-map C
        feat_a = jax.random.normal(ka, (N, c_half, H, W), jnp.float32)
        feat_b = jax.random.normal(kb, (N, c_half, H, W), jnp.float32)

        out = jax.block_until_ready(fwd(layers, feat_a, feat_b))
        expect = jax.block_until_ready(ref(layers, feat_a, feat_b))

        assert out.shape == (N, 2, H, W), (out.shape, (N, 2, H, W))
        err = float(jnp.max(jnp.abs(out - expect)))
        # bf16 MXU operands with f32 accumulation; same rounding points as the
        # validated v1 kernel, so 2e-2 remains a comfortable bound here.
        assert err < 2e-2, err

    print("KERNEL_OK")
</pallas_src>

<mosaic_0001>
module attributes {stable_mosaic.version = 11 : i64} {
  func.func @kernel(%arg0: i32, %arg1: memref<1x64x256xbf16, #tpu.memory_space<vmem>>, %arg2: memref<9x256xf32, #tpu.memory_space<vmem>>, %arg3: memref<144x64xbf16, #tpu.memory_space<vmem>>, %arg4: memref<16x1xf32, #tpu.memory_space<vmem>>, %arg5: memref<144x16xbf16, #tpu.memory_space<vmem>>, %arg6: memref<16x1xf32, #tpu.memory_space<vmem>>, %arg7: memref<8x16xbf16, #tpu.memory_space<vmem>>, %arg8: memref<8x1xf32, #tpu.memory_space<vmem>>, %arg9: memref<2x8xbf16, #tpu.memory_space<vmem>>, %arg10: memref<2x1xf32, #tpu.memory_space<vmem>>, %arg11: memref<1x2x256xf32, #tpu.memory_space<vmem>>) attributes {dimension_semantics = [#tpu.dimension_semantics<parallel>], iteration_bounds = array<i64: 2>, scalar_prefetch = 0 : i64, scratch_operands = 0 : i64, tpu.core_type = #tpu.core_type<tc>, window_params = [{transform_indices = @transform_0, window_bounds = array<i64: 1, 64, 256>}, {pipeline_mode = #tpu.pipeline_mode<synchronous>, transform_indices = @transform_1, window_bounds = array<i64: 9, 256>}, {pipeline_mode = #tpu.pipeline_mode<synchronous>, transform_indices = @transform_2, window_bounds = array<i64: 144, 64>}, {pipeline_mode = #tpu.pipeline_mode<synchronous>, transform_indices = @transform_3, window_bounds = array<i64: 16, 1>}, {pipeline_mode = #tpu.pipeline_mode<synchronous>, transform_indices = @transform_4, window_bounds = array<i64: 144, 16>}, {pipeline_mode = #tpu.pipeline_mode<synchronous>, transform_indices = @transform_5, window_bounds = array<i64: 16, 1>}, {pipeline_mode = #tpu.pipeline_mode<synchronous>, transform_indices = @transform_6, window_bounds = array<i64: 8, 16>}, {pipeline_mode = #tpu.pipeline_mode<synchronous>, transform_indices = @transform_7, window_bounds = array<i64: 8, 1>}, {pipeline_mode = #tpu.pipeline_mode<synchronous>, transform_indices = @transform_8, window_bounds = array<i64: 2, 8>}, {pipeline_mode = #tpu.pipeline_mode<synchronous>, transform_indices = @transform_9, window_bounds = array<i64: 2, 1>}, {transform_indices = @transform_10, window_bounds = array<i64: 1, 2, 256>}]} {
    %c0 = arith.constant 0 : index
    %c0_0 = arith.constant 0 : index
    %c0_1 = arith.constant 0 : index
    %0 = vector.load %arg1[%c0, %c0_0, %c0_1] : memref<1x64x256xbf16, #tpu.memory_space<vmem>>, vector<1x64x256xbf16>
    %1 = vector.shape_cast %0 : vector<1x64x256xbf16> to vector<64x256xbf16>
    %c0_2 = arith.constant 0 : index
    %c0_3 = arith.constant 0 : index
    %2 = vector.load %arg3[%c0_2, %c0_3] : memref<144x64xbf16, #tpu.memory_space<vmem>>, vector<144x64xbf16>
    %cst = arith.constant dense<0.000000e+00> : vector<144x256xf32>
    %3 = tpu.matmul %2, %1, %cst {dimension_numbers = #tpu.dot_dimension_numbers<[1], [0], [0], [1], [0, 0, 1, 1], [], []>} : vector<144x64xbf16>, vector<64x256xbf16>, vector<144x256xf32> -> vector<144x256xf32>
    %4 = vector.extract_strided_slice %3 {offsets = [64, 0], sizes = [16, 256], strides = [1, 1]} : vector<144x256xf32> to vector<16x256xf32>
    %5 = vector.extract_strided_slice %3 {offsets = [0, 0], sizes = [16, 256], strides = [1, 1]} : vector<144x256xf32> to vector<16x256xf32>
    %c17_i32 = arith.constant 17 : i32
    %6 = tpu.dynamic_rotate %5 by %c17_i32 dim 1 : vector<16x256xf32>, i32 -> vector<16x256xf32>
    %c0_4 = arith.constant 0 : index
    %c0_5 = arith.constant 0 : index
    %7 = vector.load %arg2[%c0_4, %c0_5] : memref<9x256xf32, #tpu.memory_space<vmem>>, vector<1x256xf32>
    %8 = vector.broadcast %7 : vector<1x256xf32> to vector<16x256xf32>
    %9 = arith.mulf %6, %8 : vector<16x256xf32>
    %10 = arith.addf %4, %9 : vector<16x256xf32>
    %11 = vector.extract_strided_slice %3 {offsets = [16, 0], sizes = [16, 256], strides = [1, 1]} : vector<144x256xf32> to vector<16x256xf32>
    %c16_i32 = arith.constant 16 : i32
    %12 = tpu.dynamic_rotate %11 by %c16_i32 dim 1 : vector<16x256xf32>, i32 -> vector<16x256xf32>
    %c1 = arith.constant 1 : index
    %c0_6 = arith.constant 0 : index
    %13 = vector.load %arg2[%c1, %c0_6] : memref<9x256xf32, #tpu.memory_space<vmem>>, vector<1x256xf32>
    %14 = vector.broadcast %13 : vector<1x256xf32> to vector<16x256xf32>
    %15 = arith.mulf %12, %14 : vector<16x256xf32>
    %16 = arith.addf %10, %15 : vector<16x256xf32>
    %17 = vector.extract_strided_slice %3 {offsets = [32, 0], sizes = [16, 256], strides = [1, 1]} : vector<144x256xf32> to vector<16x256xf32>
    %c15_i32 = arith.constant 15 : i32
    %18 = tpu.dynamic_rotate %17 by %c15_i32 dim 1 : vector<16x256xf32>, i32 -> vector<16x256xf32>
    %c2 = arith.constant 2 : index
    %c0_7 = arith.constant 0 : index
    %19 = vector.load %arg2[%c2, %c0_7] : memref<9x256xf32, #tpu.memory_space<vmem>>, vector<1x256xf32>
    %20 = vector.broadcast %19 : vector<1x256xf32> to vector<16x256xf32>
    %21 = arith.mulf %18, %20 : vector<16x256xf32>
    %22 = arith.addf %16, %21 : vector<16x256xf32>
    %23 = vector.extract_strided_slice %3 {offsets = [48, 0], sizes = [16, 256], strides = [1, 1]} : vector<144x256xf32> to vector<16x256xf32>
    %c1_i32 = arith.constant 1 : i32
    %24 = tpu.dynamic_rotate %23 by %c1_i32 dim 1 : vector<16x256xf32>, i32 -> vector<16x256xf32>
    %c3 = arith.constant 3 : index
    %c0_8 = arith.constant 0 : index
    %25 = vector.load %arg2[%c3, %c0_8] : memref<9x256xf32, #tpu.memory_space<vmem>>, vector<1x256xf32>
    %26 = vector.broadcast %25 : vector<1x256xf32> to vector<16x256xf32>
    %27 = arith.mulf %24, %26 : vector<16x256xf32>
    %28 = arith.addf %22, %27 : vector<16x256xf32>
    %29 = vector.extract_strided_slice %3 {offsets = [80, 0], sizes = [16, 256], strides = [1, 1]} : vector<144x256xf32> to vector<16x256xf32>
    %c255_i32 = arith.constant 255 : i32
    %30 = tpu.dynamic_rotate %29 by %c255_i32 dim 1 : vector<16x256xf32>, i32 -> vector<16x256xf32>
    %c5 = arith.constant 5 : index
    %c0_9 = arith.constant 0 : index
    %31 = vector.load %arg2[%c5, %c0_9] : memref<9x256xf32, #tpu.memory_space<vmem>>, vector<1x256xf32>
    %32 = vector.broadcast %31 : vector<1x256xf32> to vector<16x256xf32>
    %33 = arith.mulf %30, %32 : vector<16x256xf32>
    %34 = arith.addf %28, %33 : vector<16x256xf32>
    %35 = vector.extract_strided_slice %3 {offsets = [96, 0], sizes = [16, 256], strides = [1, 1]} : vector<144x256xf32> to vector<16x256xf32>
    %c241_i32 = arith.constant 241 : i32
    %36 = tpu.dynamic_rotate %35 by %c241_i32 dim 1 : vector<16x256xf32>, i32 -> vector<16x256xf32>
    %c6 = arith.constant 6 : index
    %c0_10 = arith.constant 0 : index
    %37 = vector.load %arg2[%c6, %c0_10] : memref<9x256xf32, #tpu.memory_space<vmem>>, vector<1x256xf32>
    %38 = vector.broadcast %37 : vector<1x256xf32> to vector<16x256xf32>
    %39 = arith.mulf %36, %38 : vector<16x256xf32>
    %40 = arith.addf %34, %39 : vector<16x256xf32>
    %41 = vector.extract_strided_slice %3 {offsets = [112, 0], sizes = [16, 256], strides = [1, 1]} : vector<144x256xf32> to vector<16x256xf32>
    %c240_i32 = arith.constant 240 : i32
    %42 = tpu.dynamic_rotate %41 by %c240_i32 dim 1 : vector<16x256xf32>, i32 -> vector<16x256xf32>
    %c7 = arith.constant 7 : index
    %c0_11 = arith.constant 0 : index
    %43 = vector.load %arg2[%c7, %c0_11] : memref<9x256xf32, #tpu.memory_space<vmem>>, vector<1x256xf32>
    %44 = vector.broadcast %43 : vector<1x256xf32> to vector<16x256xf32>
    %45 = arith.mulf %42, %44 : vector<16x256xf32>
    %46 = arith.addf %40, %45 : vector<16x256xf32>
    %47 = vector.extract_strided_slice %3 {offsets = [128, 0], sizes = [16, 256], strides = [1, 1]} : vector<144x256xf32> to vector<16x256xf32>
    %c239_i32 = arith.constant 239 : i32
    %48 = tpu.dynamic_rotate %47 by %c239_i32 dim 1 : vector<16x256xf32>, i32 -> vector<16x256xf32>
    %c8 = arith.constant 8 : index
    %c0_12 = arith.constant 0 : index
    %49 = vector.load %arg2[%c8, %c0_12] : memref<9x256xf32, #tpu.memory_space<vmem>>, vector<1x256xf32>
    %50 = vector.broadcast %49 : vector<1x256xf32> to vector<16x256xf32>
    %51 = arith.mulf %48, %50 : vector<16x256xf32>
    %52 = arith.addf %46, %51 : vector<16x256xf32>
    %c0_13 = arith.constant 0 : index
    %c0_14 = arith.constant 0 : index
    %53 = vector.load %arg4[%c0_13, %c0_14] : memref<16x1xf32, #tpu.memory_space<vmem>>, vector<16x1xf32>
    %54 = vector.broadcast %53 : vector<16x1xf32> to vector<16x256xf32>
    %55 = arith.addf %52, %54 : vector<16x256xf32>
    %cst_15 = arith.constant 2.000000e-01 : f32
    %56 = vector.broadcast %cst_15 : f32 to vector<16x256xf32>
    %57 = arith.mulf %56, %55 : vector<16x256xf32>
    %58 = arith.maximumf %55, %57 : vector<16x256xf32>
    %59 = arith.truncf %58 : vector<16x256xf32> to vector<16x256xbf16>
    %c0_16 = arith.constant 0 : index
    %c0_17 = arith.constant 0 : index
    %60 = vector.load %arg5[%c0_16, %c0_17] : memref<144x16xbf16, #tpu.memory_space<vmem>>, vector<144x16xbf16>
    %cst_18 = arith.constant dense<0.000000e+00> : vector<144x256xf32>
    %61 = tpu.matmul %60, %59, %cst_18 {dimension_numbers = #tpu.dot_dimension_numbers<[1], [0], [0], [1], [0, 0, 1, 1], [], []>} : vector<144x16xbf16>, vector<16x256xbf16>, vector<144x256xf32> -> vector<144x256xf32>
    %62 = vector.extract_strided_slice %61 {offsets = [64, 0], sizes = [16, 256], strides = [1, 1]} : vector<144x256xf32> to vector<16x256xf32>
    %63 = vector.extract_strided_slice %61 {offsets = [0, 0], sizes = [16, 256], strides = [1, 1]} : vector<144x256xf32> to vector<16x256xf32>
    %c17_i32_19 = arith.constant 17 : i32
    %64 = tpu.dynamic_rotate %63 by %c17_i32_19 dim 1 : vector<16x256xf32>, i32 -> vector<16x256xf32>
    %c0_20 = arith.constant 0 : index
    %c0_21 = arith.constant 0 : index
    %65 = vector.load %arg2[%c0_20, %c0_21] : memref<9x256xf32, #tpu.memory_space<vmem>>, vector<1x256xf32>
    %66 = vector.broadcast %65 : vector<1x256xf32> to vector<16x256xf32>
    %67 = arith.mulf %64, %66 : vector<16x256xf32>
    %68 = arith.addf %62, %67 : vector<16x256xf32>
    %69 = vector.extract_strided_slice %61 {offsets = [16, 0], sizes = [16, 256], strides = [1, 1]} : vector<144x256xf32> to vector<16x256xf32>
    %c16_i32_22 = arith.constant 16 : i32
    %70 = tpu.dynamic_rotate %69 by %c16_i32_22 dim 1 : vector<16x256xf32>, i32 -> vector<16x256xf32>
    %c1_23 = arith.constant 1 : index
    %c0_24 = arith.constant 0 : index
    %71 = vector.load %arg2[%c1_23, %c0_24] : memref<9x256xf32, #tpu.memory_space<vmem>>, vector<1x256xf32>
    %72 = vector.broadcast %71 : vector<1x256xf32> to vector<16x256xf32>
    %73 = arith.mulf %70, %72 : vector<16x256xf32>
    %74 = arith.addf %68, %73 : vector<16x256xf32>
    %75 = vector.extract_strided_slice %61 {offsets = [32, 0], sizes = [16, 256], strides = [1, 1]} : vector<144x256xf32> to vector<16x256xf32>
    %c15_i32_25 = arith.constant 15 : i32
    %76 = tpu.dynamic_rotate %75 by %c15_i32_25 dim 1 : vector<16x256xf32>, i32 -> vector<16x256xf32>
    %c2_26 = arith.constant 2 : index
    %c0_27 = arith.constant 0 : index
    %77 = vector.load %arg2[%c2_26, %c0_27] : memref<9x256xf32, #tpu.memory_space<vmem>>, vector<1x256xf32>
    %78 = vector.broadcast %77 : vector<1x256xf32> to vector<16x256xf32>
    %79 = arith.mulf %76, %78 : vector<16x256xf32>
    %80 = arith.addf %74, %79 : vector<16x256xf32>
    %81 = vector.extract_strided_slice %61 {offsets = [48, 0], sizes = [16, 256], strides = [1, 1]} : vector<144x256xf32> to vector<16x256xf32>
    %c1_i32_28 = arith.constant 1 : i32
    %82 = tpu.dynamic_rotate %81 by %c1_i32_28 dim 1 : vector<16x256xf32>, i32 -> vector<16x256xf32>
    %c3_29 = arith.constant 3 : index
    %c0_30 = arith.constant 0 : index
    %83 = vector.load %arg2[%c3_29, %c0_30] : memref<9x256xf32, #tpu.memory_space<vmem>>, vector<1x256xf32>
    %84 = vector.broadcast %83 : vector<1x256xf32> to vector<16x256xf32>
    %85 = arith.mulf %82, %84 : vector<16x256xf32>
    %86 = arith.addf %80, %85 : vector<16x256xf32>
    %87 = vector.extract_strided_slice %61 {offsets = [80, 0], sizes = [16, 256], strides = [1, 1]} : vector<144x256xf32> to vector<16x256xf32>
    %c255_i32_31 = arith.constant 255 : i32
    %88 = tpu.dynamic_rotate %87 by %c255_i32_31 dim 1 : vector<16x256xf32>, i32 -> vector<16x256xf32>
    %c5_32 = arith.constant 5 : index
    %c0_33 = arith.constant 0 : index
    %89 = vector.load %arg2[%c5_32, %c0_33] : memref<9x256xf32, #tpu.memory_space<vmem>>, vector<1x256xf32>
    %90 = vector.broadcast %89 : vector<1x256xf32> to vector<16x256xf32>
    %91 = arith.mulf %88, %90 : vector<16x256xf32>
    %92 = arith.addf %86, %91 : vector<16x256xf32>
    %93 = vector.extract_strided_slice %61 {offsets = [96, 0], sizes = [16, 256], strides = [1, 1]} : vector<144x256xf32> to vector<16x256xf32>
    %c241_i32_34 = arith.constant 241 : i32
    %94 = tpu.dynamic_rotate %93 by %c241_i32_34 dim 1 : vector<16x256xf32>, i32 -> vector<16x256xf32>
    %c6_35 = arith.constant 6 : index
    %c0_36 = arith.constant 0 : index
    %95 = vector.load %arg2[%c6_35, %c0_36] : memref<9x256xf32, #tpu.memory_space<vmem>>, vector<1x256xf32>
    %96 = vector.broadcast %95 : vector<1x256xf32> to vector<16x256xf32>
    %97 = arith.mulf %94, %96 : vector<16x256xf32>
    %98 = arith.addf %92, %97 : vector<16x256xf32>
    %99 = vector.extract_strided_slice %61 {offsets = [112, 0], sizes = [16, 256], strides = [1, 1]} : vector<144x256xf32> to vector<16x256xf32>
    %c240_i32_37 = arith.constant 240 : i32
    %100 = tpu.dynamic_rotate %99 by %c240_i32_37 dim 1 : vector<16x256xf32>, i32 -> vector<16x256xf32>
    %c7_38 = arith.constant 7 : index
    %c0_39 = arith.constant 0 : index
    %101 = vector.load %arg2[%c7_38, %c0_39] : memref<9x256xf32, #tpu.memory_space<vmem>>, vector<1x256xf32>
    %102 = vector.broadcast %101 : vector<1x256xf32> to vector<16x256xf32>
    %103 = arith.mulf %100, %102 : vector<16x256xf32>
    %104 = arith.addf %98, %103 : vector<16x256xf32>
    %105 = vector.extract_strided_slice %61 {offsets = [128, 0], sizes = [16, 256], strides = [1, 1]} : vector<144x256xf32> to vector<16x256xf32>
    %c239_i32_40 = arith.constant 239 : i32
    %106 = tpu.dynamic_rotate %105 by %c239_i32_40 dim 1 : vector<16x256xf32>, i32 -> vector<16x256xf32>
    %c8_41 = arith.constant 8 : index
    %c0_42 = arith.constant 0 : index
    %107 = vector.load %arg2[%c8_41, %c0_42] : memref<9x256xf32, #tpu.memory_space<vmem>>, vector<1x256xf32>
    %108 = vector.broadcast %107 : vector<1x256xf32> to vector<16x256xf32>
    %109 = arith.mulf %106, %108 : vector<16x256xf32>
    %110 = arith.addf %104, %109 : vector<16x256xf32>
    %c0_43 = arith.constant 0 : index
    %c0_44 = arith.constant 0 : index
    %111 = vector.load %arg6[%c0_43, %c0_44] : memref<16x1xf32, #tpu.memory_space<vmem>>, vector<16x1xf32>
    %112 = vector.broadcast %111 : vector<16x1xf32> to vector<16x256xf32>
    %113 = arith.addf %110, %112 : vector<16x256xf32>
    %cst_45 = arith.constant 2.000000e-01 : f32
    %114 = vector.broadcast %cst_45 : f32 to vector<16x256xf32>
    %115 = arith.mulf %114, %113 : vector<16x256xf32>
    %116 = arith.maximumf %113, %115 : vector<16x256xf32>
    %117 = arith.truncf %116 : vector<16x256xf32> to vector<16x256xbf16>
    %c0_46 = arith.constant 0 : index
    %c0_47 = arith.constant 0 : index
    %118 = vector.load %arg7[%c0_46, %c0_47] : memref<8x16xbf16, #tpu.memory_space<vmem>>, vector<8x16xbf16>
    %cst_48 = arith.constant dense<0.000000e+00> : vector<8x256xf32>
    %119 = tpu.matmul %118, %117, %cst_48 {dimension_numbers = #tpu.dot_dimension_numbers<[1], [0], [0], [1], [0, 0, 1, 1], [], []>} : vector<8x16xbf16>, vector<16x256xbf16>, vector<8x256xf32> -> vector<8x256xf32>
    %c0_49 = arith.constant 0 : index
    %c0_50 = arith.constant 0 : index
    %120 = vector.load %arg8[%c0_49, %c0_50] : memref<8x1xf32, #tpu.memory_space<vmem>>, vector<8x1xf32>
    %121 = vector.broadcast %120 : vector<8x1xf32> to vector<8x256xf32>
    %122 = arith.addf %119, %121 : vector<8x256xf32>
    %cst_51 = arith.constant 2.000000e-01 : f32
    %123 = vector.broadcast %cst_51 : f32 to vector<8x256xf32>
    %124 = arith.mulf %123, %122 : vector<8x256xf32>
    %125 = arith.maximumf %122, %124 : vector<8x256xf32>
    %126 = arith.truncf %125 : vector<8x256xf32> to vector<8x256xbf16>
    %c0_52 = arith.constant 0 : index
    %c0_53 = arith.constant 0 : index
    %127 = vector.load %arg9[%c0_52, %c0_53] : memref<2x8xbf16, #tpu.memory_space<vmem>>, vector<2x8xbf16>
    %cst_54 = arith.constant dense<0.000000e+00> : vector<2x256xf32>
    %128 = tpu.matmul %127, %126, %cst_54 {dimension_numbers = #tpu.dot_dimension_numbers<[1], [0], [0], [1], [0, 0, 1, 1], [], []>} : vector<2x8xbf16>, vector<8x256xbf16>, vector<2x256xf32> -> vector<2x256xf32>
    %c0_55 = arith.constant 0 : index
    %c0_56 = arith.constant 0 : index
    %129 = vector.load %arg10[%c0_55, %c0_56] : memref<2x1xf32, #tpu.memory_space<vmem>>, vector<2x1xf32>
    %130 = vector.broadcast %129 : vector<2x1xf32> to vector<2x256xf32>
    %131 = arith.addf %128, %130 : vector<2x256xf32>
    %c0_57 = arith.constant 0 : index
    %c0_58 = arith.constant 0 : index
    %c0_59 = arith.constant 0 : index
    %132 = vector.load %arg11[%c0_57, %c0_58, %c0_59] : memref<1x2x256xf32, #tpu.memory_space<vmem>>, vector<1x2x256xf32>
    %133 = vector.shape_cast %132 : vector<1x2x256xf32> to vector<2x256xf32>
    %134 = vector.shape_cast %131 : vector<2x256xf32> to vector<1x2x256xf32>
    tpu.vector_store %arg11[%c0_57, %c0_58, %c0_59], %134 {strides = array<i32>} : memref<1x2x256xf32, #tpu.memory_space<vmem>>, vector<1x2x256xf32>,
    return
  }
  func.func @transform_0(%arg0: i32) -> (i32, i32, i32) {
    %c0_i32 = arith.constant 0 : i32
    %c0_i32_0 = arith.constant 0 : i32
    %c0_i32_1 = arith.constant 0 : i32
    return %arg0, %c0_i32, %c0_i32_0 : i32, i32, i32
  }
  func.func @transform_1(%arg0: i32) -> (i32, i32) {
    %c0_i32 = arith.constant 0 : i32
    %c0_i32_0 = arith.constant 0 : i32
    %c0_i32_1 = arith.constant 0 : i32
    return %c0_i32, %c0_i32_0 : i32, i32
  }
  func.func @transform_2(%arg0: i32) -> (i32, i32) {
    %c0_i32 = arith.constant 0 : i32
    %c0_i32_0 = arith.constant 0 : i32
    %c0_i32_1 = arith.constant 0 : i32
    return %c0_i32, %c0_i32_0 : i32, i32
  }
  func.func @transform_3(%arg0: i32) -> (i32, i32) {
    %c0_i32 = arith.constant 0 : i32
    %c0_i32_0 = arith.constant 0 : i32
    %c0_i32_1 = arith.constant 0 : i32
    return %c0_i32, %c0_i32_0 : i32, i32
  }
  func.func @transform_4(%arg0: i32) -> (i32, i32) {
    %c0_i32 = arith.constant 0 : i32
    %c0_i32_0 = arith.constant 0 : i32
    %c0_i32_1 = arith.constant 0 : i32
    return %c0_i32, %c0_i32_0 : i32, i32
  }
  func.func @transform_5(%arg0: i32) -> (i32, i32) {
    %c0_i32 = arith.constant 0 : i32
    %c0_i32_0 = arith.constant 0 : i32
    %c0_i32_1 = arith.constant 0 : i32
    return %c0_i32, %c0_i32_0 : i32, i32
  }
  func.func @transform_6(%arg0: i32) -> (i32, i32) {
    %c0_i32 = arith.constant 0 : i32
    %c0_i32_0 = arith.constant 0 : i32
    %c0_i32_1 = arith.constant 0 : i32
    return %c0_i32, %c0_i32_0 : i32, i32
  }
  func.func @transform_7(%arg0: i32) -> (i32, i32) {
    %c0_i32 = arith.constant 0 : i32
    %c0_i32_0 = arith.constant 0 : i32
    %c0_i32_1 = arith.constant 0 : i32
    return %c0_i32, %c0_i32_0 : i32, i32
  }
  func.func @transform_8(%arg0: i32) -> (i32, i32) {
    %c0_i32 = arith.constant 0 : i32
    %c0_i32_0 = arith.constant 0 : i32
    %c0_i32_1 = arith.constant 0 : i32
    return %c0_i32, %c0_i32_0 : i32, i32
  }
  func.func @transform_9(%arg0: i32) -> (i32, i32) {
    %c0_i32 = arith.constant 0 : i32
    %c0_i32_0 = arith.constant 0 : i32
    %c0_i32_1 = arith.constant 0 : i32
    return %c0_i32, %c0_i32_0 : i32, i32
  }
  func.func @transform_10(%arg0: i32) -> (i32, i32, i32) {
    %c0_i32 = arith.constant 0 : i32
    %c0_i32_0 = arith.constant 0 : i32
    %c0_i32_1 = arith.constant 0 : i32
    return %arg0, %c0_i32, %c0_i32_0 : i32, i32, i32
  }
}

</mosaic_0001>

<llo_original>
// kernel: flow_estimator_forward.1
$region0: #{flow_estimator_forward.1}
  #allocation0 [shape = 'u32[]', space=smem, size = 0x4, offset = 0x4, fixed_abs, tag = 'smem constant byte address 0x4 - core index']
  #allocation1 [shape = 'u32[72,128]{1,0:T(1,128)}', space=vmem, size = 0x9000, scoped, tag = 'internal scratch']
  %s0 = inlined_call_operand.vmem [shape: bf16[2,64,256], index: 0, kind: input, shape index: {}]
  %s1 = inlined_call_operand.vmem [shape: f32[9,256], index: 1, kind: input, shape index: {}]
  %s2 = inlined_call_operand.vmem [shape: bf16[144,64], index: 2, kind: input, shape index: {}]
  %s3 = inlined_call_operand.vmem [shape: f32[16,1], index: 3, kind: input, shape index: {}]
  %s4 = inlined_call_operand.vmem [shape: bf16[144,16], index: 4, kind: input, shape index: {}]
  %s5 = inlined_call_operand.vmem [shape: f32[16,1], index: 5, kind: input, shape index: {}]
  %s6 = inlined_call_operand.vmem [shape: bf16[8,16], index: 6, kind: input, shape index: {}]
  %s7 = inlined_call_operand.vmem [shape: f32[8,1], index: 7, kind: input, shape index: {}]
  %s8 = inlined_call_operand.vmem [shape: bf16[2,8], index: 8, kind: input, shape index: {}]
  %s9 = inlined_call_operand.vmem [shape: f32[2,1], index: 9, kind: input, shape index: {}]
  %s10 = inlined_call_operand.vmem [shape: f32[2,2,256], index: 10, kind: output, shape index: {}]
  %s11 = sld [smem:[#allocation0]]
  $region73: #{flow_estimator_forward.1} parent=0
    _
  %s13 = ssub.s32 1, %s11
  %s14 = scalar_select 0, %s13, %s11
  loop: start=0, step=1, limit=4
  $region2: #{flow_estimator_forward.1} parent=0 // loop_pre_header
    _
  $region3: #{flow_estimator_forward.1} parent=0 // loop_header
    %s16 = sphi 0, %s20
    %p17 = scmp.ge.s32.totalorder %s16, 4
    %s26 = sphi 0, %s28
    %s29 = sphi 0, %s26
    %s30 = sphi 0, %s29
    %s46 = sphi 0, %s30
    %s50 = sphi 0, %s50
    %s52 = sphi 0, %s50
    %s53 = sphi 0, %s52
    %s67 = sphi 0, %s53
    %s71 = sphi 0, %s71
    %s73 = sphi 0, %s71
    %s74 = sphi 0, %s73
    %s88 = sphi 0, %s74
    %s92 = sphi 0, %s92
    %s94 = sphi 0, %s92
    %s95 = sphi 0, %s94
    %s109 = sphi 0, %s95
    %s113 = sphi 0, %s113
    %s115 = sphi 0, %s113
    %s116 = sphi 0, %s115
    %s130 = sphi 0, %s116
    %s134 = sphi 0, %s134
    %s136 = sphi 0, %s134
    %s137 = sphi 0, %s136
    %s151 = sphi 0, %s137
    %s155 = sphi 0, %s155
    %s157 = sphi 0, %s155
    %s158 = sphi 0, %s157
    %s172 = sphi 0, %s158
    %s176 = sphi 0, %s176
    %s178 = sphi 0, %s176
    %s179 = sphi 0, %s178
    %s193 = sphi 0, %s179
    %s197 = sphi 0, %s197
    %s199 = sphi 0, %s197
    %s200 = sphi 0, %s199
    %s214 = sphi 0, %s200
    %s218 = sphi 0, %s218
    %s220 = sphi 0, %s218
    %s221 = sphi 0, %s220
    %s235 = sphi 0, %s221
    %s241 = sphi 0, %s243
    %s244 = sphi 0, %s241
    %s245 = sphi 0, %s244
    %s261 = sphi 0, %s245
  $region4: #{flow_estimator_forward.1} parent=0 // loop_header_branch
    %19 = sbr.rel (%p17) target = $region8
  $region5: #{flow_estimator_forward.1} parent=0 // loop_body
    %s21 = ssub.s32 %s16, 1
    %s22 = ssub.s32 %s16, 2
    %s23 = sadd.s32 %s16, 1
    %s24 = ssub.s32 %s16, %s23
    %p25 = scmp.eq.s32.totalorder %s24, 0
    %s27 = sadd.s32 %s26, 1
    %s28 = scalar_select %p25, %s26, %s27
    %p31 = pneg %p25
    %p32 = scmp.eq.s32.totalorder %s16, 1
    %p33 = por %p31, %p32
    %p34 = scmp.ne.s32.totalorder %s26, %s29
    %p35 = scmp.eq.s32.totalorder %s16, 0
    %p36 = por %p34, %p35
    %p37 = scmp.ne.s32.totalorder %s26, %s29
    %p38 = scmp.eq.s32.totalorder %s21, 1
    %p39 = por %p37, %p38
    %p40 = scmp.ne.s32.totalorder %s29, %s30
    %p41 = scmp.eq.s32.totalorder %s21, 0
    %p42 = por %p40, %p41
    %p43 = scmp.ne.s32.totalorder %s29, %s30
    %p44 = scmp.eq.s32.totalorder %s22, 1
    %p45 = por %p43, %p44
    %p47 = scmp.ne.s32.totalorder %s30, %s46
    %p48 = scmp.eq.s32.totalorder %s22, 0
    %p49 = por %p47, %p48
    %s51 = sadd.s32 %s50, 1
    %p54 = scmp.eq.s32.totalorder %s16, 1
    %p55 = scmp.ne.s32.totalorder %s50, %s52
    %p56 = scmp.eq.s32.totalorder %s16, 0
    %p57 = por %p55, %p56
    %p58 = scmp.ne.s32.totalorder %s50, %s52
    %p59 = scmp.eq.s32.totalorder %s21, 1
    %p60 = por %p58, %p59
    %p61 = scmp.ne.s32.totalorder %s52, %s53
    %p62 = scmp.eq.s32.totalorder %s21, 0
    %p63 = por %p61, %p62
    %p64 = scmp.ne.s32.totalorder %s52, %s53
    %p65 = scmp.eq.s32.totalorder %s22, 1
    %p66 = por %p64, %p65
    %p68 = scmp.ne.s32.totalorder %s53, %s67
    %p69 = scmp.eq.s32.totalorder %s22, 0
    %p70 = por %p68, %p69
    %s72 = sadd.s32 %s71, 1
    %p75 = scmp.eq.s32.totalorder %s16, 1
    %p76 = scmp.ne.s32.totalorder %s71, %s73
    %p77 = scmp.eq.s32.totalorder %s16, 0
    %p78 = por %p76, %p77
    %p79 = scmp.ne.s32.totalorder %s71, %s73
    %p80 = scmp.eq.s32.totalorder %s21, 1
    %p81 = por %p79, %p80
    %p82 = scmp.ne.s32.totalorder %s73, %s74
    %p83 = scmp.eq.s32.totalorder %s21, 0
    %p84 = por %p82, %p83
    %p85 = scmp.ne.s32.totalorder %s73, %s74
    %p86 = scmp.eq.s32.totalorder %s22, 1
    %p87 = por %p85, %p86
    %p89 = scmp.ne.s32.totalorder %s74, %s88
    %p90 = scmp.eq.s32.totalorder %s22, 0
    %p91 = por %p89, %p90
    %s93 = sadd.s32 %s92, 1
    %p96 = scmp.eq.s32.totalorder %s16, 1
    %p97 = scmp.ne.s32.totalorder %s92, %s94
    %p98 = scmp.eq.s32.totalorder %s16, 0
    %p99 = por %p97, %p98
    %p100 = scmp.ne.s32.totalorder %s92, %s94
    %p101 = scmp.eq.s32.totalorder %s21, 1
    %p102 = por %p100, %p101
    %p103 = scmp.ne.s32.totalorder %s94, %s95
    %p104 = scmp.eq.s32.totalorder %s21, 0
    %p105 = por %p103, %p104
    %p106 = scmp.ne.s32.totalorder %s94, %s95
    %p107 = scmp.eq.s32.totalorder %s22, 1
    %p108 = por %p106, %p107
    %p110 = scmp.ne.s32.totalorder %s95, %s109
    %p111 = scmp.eq.s32.totalorder %s22, 0
    %p112 = por %p110, %p111
    %s114 = sadd.s32 %s113, 1
    %p117 = scmp.eq.s32.totalorder %s16, 1
    %p118 = scmp.ne.s32.totalorder %s113, %s115
    %p119 = scmp.eq.s32.totalorder %s16, 0
    %p120 = por %p118, %p119
    %p121 = scmp.ne.s32.totalorder %s113, %s115
    %p122 = scmp.eq.s32.totalorder %s21, 1
    %p123 = por %p121, %p122
    %p124 = scmp.ne.s32.totalorder %s115, %s116
    %p125 = scmp.eq.s32.totalorder %s21, 0
    %p126 = por %p124, %p125
    %p127 = scmp.ne.s32.totalorder %s115, %s116
    %p128 = scmp.eq.s32.totalorder %s22, 1
    %p129 = por %p127, %p128
    %p131 = scmp.ne.s32.totalorder %s116, %s130
    %p132 = scmp.eq.s32.totalorder %s22, 0
    %p133 = por %p131, %p132
    %s135 = sadd.s32 %s134, 1
    %p138 = scmp.eq.s32.totalorder %s16, 1
    %p139 = scmp.ne.s32.totalorder %s134, %s136
    %p140 = scmp.eq.s32.totalorder %s16, 0
    %p141 = por %p139, %p140
    %p142 = scmp.ne.s32.totalorder %s134, %s136
    %p143 = scmp.eq.s32.totalorder %s21, 1
    %p144 = por %p142, %p143
    %p145 = scmp.ne.s32.totalorder %s136, %s137
    %p146 = scmp.eq.s32.totalorder %s21, 0
    %p147 = por %p145, %p146
    %p148 = scmp.ne.s32.totalorder %s136, %s137
    %p149 = scmp.eq.s32.totalorder %s22, 1
    %p150 = por %p148, %p149
    %p152 = scmp.ne.s32.totalorder %s137, %s151
    %p153 = scmp.eq.s32.totalorder %s22, 0
    %p154 = por %p152, %p153
    %s156 = sadd.s32 %s155, 1
    %p159 = scmp.eq.s32.totalorder %s16, 1
    %p160 = scmp.ne.s32.totalorder %s155, %s157
    %p161 = scmp.eq.s32.totalorder %s16, 0
    %p162 = por %p160, %p161
    %p163 = scmp.ne.s32.totalorder %s155, %s157
    %p164 = scmp.eq.s32.totalorder %s21, 1
    %p165 = por %p163, %p164
    %p166 = scmp.ne.s32.totalorder %s157, %s158
    %p167 = scmp.eq.s32.totalorder %s21, 0
    %p168 = por %p166, %p167
    %p169 = scmp.ne.s32.totalorder %s157, %s158
    %p170 = scmp.eq.s32.totalorder %s22, 1
    %p171 = por %p169, %p170
    %p173 = scmp.ne.s32.totalorder %s158, %s172
    %p174 = scmp.eq.s32.totalorder %s22, 0
    %p175 = por %p173, %p174
    %s177 = sadd.s32 %s176, 1
    %p180 = scmp.eq.s32.totalorder %s16, 1
    %p181 = scmp.ne.s32.totalorder %s176, %s178
    %p182 = scmp.eq.s32.totalorder %s16, 0
    %p183 = por %p181, %p182
    %p184 = scmp.ne.s32.totalorder %s176, %s178
    %p185 = scmp.eq.s32.totalorder %s21, 1
    %p186 = por %p184, %p185
    %p187 = scmp.ne.s32.totalorder %s178, %s179
    %p188 = scmp.eq.s32.totalorder %s21, 0
    %p189 = por %p187, %p188
    %p190 = scmp.ne.s32.totalorder %s178, %s179
    %p191 = scmp.eq.s32.totalorder %s22, 1
    %p192 = por %p190, %p191
    %p194 = scmp.ne.s32.totalorder %s179, %s193
    %p195 = scmp.eq.s32.totalorder %s22, 0
    %p196 = por %p194, %p195
    %s198 = sadd.s32 %s197, 1
    %p201 = scmp.eq.s32.totalorder %s16, 1
    %p202 = scmp.ne.s32.totalorder %s197, %s199
    %p203 = scmp.eq.s32.totalorder %s16, 0
    %p204 = por %p202, %p203
    %p205 = scmp.ne.s32.totalorder %s197, %s199
    %p206 = scmp.eq.s32.totalorder %s21, 1
    %p207 = por %p205, %p206
    %p208 = scmp.ne.s32.totalorder %s199, %s200
    %p209 = scmp.eq.s32.totalorder %s21, 0
    %p210 = por %p208, %p209
    %p211 = scmp.ne.s32.totalorder %s199, %s200
    %p212 = scmp.eq.s32.totalorder %s22, 1
    %p213 = por %p211, %p212
    %p215 = scmp.ne.s32.totalorder %s200, %s214
    %p216 = scmp.eq.s32.totalorder %s22, 0
    %p217 = por %p215, %p216
    %s219 = sadd.s32 %s218, 1
    %p222 = scmp.eq.s32.totalorder %s16, 1
    %p223 = scmp.ne.s32.totalorder %s218, %s220
    %p224 = scmp.eq.s32.totalorder %s16, 0
    %p225 = por %p223, %p224
    %p226 = scmp.ne.s32.totalorder %s218, %s220
    %p227 = scmp.eq.s32.totalorder %s21, 1
    %p228 = por %p226, %p227
    %p229 = scmp.ne.s32.totalorder %s220, %s221
    %p230 = scmp.eq.s32.totalorder %s21, 0
    %p231 = por %p229, %p230
    %p232 = scmp.ne.s32.totalorder %s220, %s221
    %p233 = scmp.eq.s32.totalorder %s22, 1
    %p234 = por %p232, %p233
    %p236 = scmp.ne.s32.totalorder %s221, %s235
    %p237 = scmp.eq.s32.totalorder %s22, 0
    %p238 = por %p236, %p237
    %s239 = ssub.s32 %s16, %s23
    %p240 = scmp.eq.s32.totalorder %s239, 0
    %s242 = sadd.s32 %s241, 1
    %s243 = scalar_select %p240, %s241, %s242
    %p246 = pneg %p240
    %p247 = scmp.eq.s32.totalorder %s16, 1
    %p248 = por %p246, %p247
    %p249 = scmp.ne.s32.totalorder %s241, %s244
    %p250 = scmp.eq.s32.totalorder %s16, 0
    %p251 = por %p249, %p250
    %p252 = scmp.ne.s32.totalorder %s241, %s244
    %p253 = scmp.eq.s32.totalorder %s21, 1
    %p254 = por %p252, %p253
    %p255 = scmp.ne.s32.totalorder %s244, %s245
    %p256 = scmp.eq.s32.totalorder %s21, 0
    %p257 = por %p255, %p256
    %p258 = scmp.ne.s32.totalorder %s244, %s245
    %p259 = scmp.eq.s32.totalorder %s22, 1
    %p260 = por %p258, %p259
    %p262 = scmp.ne.s32.totalorder %s245, %s261
    %p263 = scmp.eq.s32.totalorder %s22, 0
    %p264 = por %p262, %p263
    %p265 = scmp.le.s32.totalorder 1, %s16
    %p266 = scmp.lt.s32.totalorder %s16, 3
    %p267 = pnand %p265, %p266
    %p268 = pneg %p267
    // Predicated region
    $region9: #{flow_estimator_forward.1} parent=5 // pred_check
      _
    $region10: #{flow_estimator_forward.1} parent=5 // pred_check_branch
      %270 = sbr.rel (%p267) target = $region12
    $region11: #{flow_estimator_forward.1} parent=5 // pred_region
      %s271 = ssub.s32 %s16, 1
      // Predicated region
      $region13: #{flow_estimator_forward.1} parent=11 // pred_check
        %p272 = pneg %p63
      $region14: #{flow_estimator_forward.1} parent=11 // pred_check_branch
        %274 = sbr.rel (%p272) target = $region16
      $region15: #{flow_estimator_forward.1} parent=11 // pred_region
        _
      $region16: #{flow_estimator_forward.1} parent=11 // pred_fallthru
        _
      // Predicated region
      $region17: #{flow_estimator_forward.1} parent=11 // pred_check
        %p275 = pneg %p84
      $region18: #{flow_estimator_forward.1} parent=11 // pred_check_branch
        %277 = sbr.rel (%p275) target = $region20
      $region19: #{flow_estimator_forward.1} parent=11 // pred_region
        _
      $region20: #{flow_estimator_forward.1} parent=11 // pred_fallthru
        _
      // Predicated region
      $region21: #{flow_estimator_forward.1} parent=11 // pred_check
        %p278 = pneg %p105
      $region22: #{flow_estimator_forward.1} parent=11 // pred_check_branch
        %280 = sbr.rel (%p278) target = $region24
      $region23: #{flow_estimator_forward.1} parent=11 // pred_region
        _
      $region24: #{flow_estimator_forward.1} parent=11 // pred_fallthru
        _
      // Predicated region
      $region25: #{flow_estimator_forward.1} parent=11 // pred_check
        %p281 = pneg %p126
      $region26: #{flow_estimator_forward.1} parent=11 // pred_check_branch
        %283 = sbr.rel (%p281) target = $region28
      $region27: #{flow_estimator_forward.1} parent=11 // pred_region
        _
      $region28: #{flow_estimator_forward.1} parent=11 // pred_fallthru
        _
      // Predicated region
      $region29: #{flow_estimator_forward.1} parent=11 // pred_check
        %p284 = pneg %p147
      $region30: #{flow_estimator_forward.1} parent=11 // pred_check_branch
        %286 = sbr.rel (%p284) target = $region32
      $region31: #{flow_estimator_forward.1} parent=11 // pred_region
        _
      $region32: #{flow_estimator_forward.1} parent=11 // pred_fallthru
        _
      // Predicated region
      $region33: #{flow_estimator_forward.1} parent=11 // pred_check
        %p287 = pneg %p168
      $region34: #{flow_estimator_forward.1} parent=11 // pred_check_branch
        %289 = sbr.rel (%p287) target = $region36
      $region35: #{flow_estimator_forward.1} parent=11 // pred_region
        _
      $region36: #{flow_estimator_forward.1} parent=11 // pred_fallthru
        _
      // Predicated region
      $region37: #{flow_estimator_forward.1} parent=11 // pred_check
        %p290 = pneg %p189
      $region38: #{flow_estimator_forward.1} parent=11 // pred_check_branch
        %292 = sbr.rel (%p290) target = $region40
      $region39: #{flow_estimator_forward.1} parent=11 // pred_region
        _
      $region40: #{flow_estimator_forward.1} parent=11 // pred_fallthru
        _
      // Predicated region
      $region41: #{flow_estimator_forward.1} parent=11 // pred_check
        %p293 = pneg %p210
      $region42: #{flow_estimator_forward.1} parent=11 // pred_check_branch
        %295 = sbr.rel (%p293) target = $region44
      $region43: #{flow_estimator_forward.1} parent=11 // pred_region
        _
      $region44: #{flow_estimator_forward.1} parent=11 // pred_fallthru
        _
      // Predicated region
      $region45: #{flow_estimator_forward.1} parent=11 // pred_check
        %p296 = pneg %p231
      $region46: #{flow_estimator_forward.1} parent=11 // pred_check_branch
        %298 = sbr.rel (%p296) target = $region48
      $region47: #{flow_estimator_forward.1} parent=11 // pred_region
        _
      $region48: #{flow_estimator_forward.1} parent=11 // pred_fallthru
        _
    $region12: #{flow_estimator_forward.1} parent=5 // pred_fallthru
      _
    %p299 = scmp.lt.s32.totalorder %s16, 2
    // Predicated region
    $region49: #{flow_estimator_forward.1} parent=5 // pred_check
      %p300 = pneg %p299
    $region50: #{flow_estimator_forward.1} parent=5 // pred_check_branch
      %302 = sbr.rel (%p300) target = $region52
    $region51: #{flow_estimator_forward.1} parent=5 // pred_region
      // Predicated region
      $region53: #{flow_estimator_forward.1} parent=51 // pred_check
        %p303 = pneg %p36
      $region54: #{flow_estimator_forward.1} parent=51 // pred_check_branch
        %305 = sbr.rel (%p303) target = $region56
      $region55: #{flow_estimator_forward.1} parent=51 // pred_region
        %p306 = scmp.lt.s32.totalorder %s16, 1
        %s307 = scalar_select %p306, %s16, 1
        %s308 = smul.addr %s307, 16
        %s309 = smul.addr %s308, 4
        %s310 = scalar_lea.vmem %s0, %s309
      $region56: #{flow_estimator_forward.1} parent=51 // pred_fallthru
        _
    $region52: #{flow_estimator_forward.1} parent=5 // pred_fallthru
      _
    %p311 = scmp.le.s32.totalorder 1, %s16
    %p312 = scmp.lt.s32.totalorder %s16, 3
    %p313 = pnand %p311, %p312
    %p314 = pneg %p313
    // Predicated region
    $region57: #{flow_estimator_forward.1} parent=5 // pred_check
      _
    $region58: #{flow_estimator_forward.1} parent=5 // pred_check_branch
      %316 = sbr.rel (%p313) target = $region60
    $region59: #{flow_estimator_forward.1} parent=5 // pred_region
      %s317 = ssub.s32 %s16, 1
      %p318 = scmp.lt.s32.totalorder %s21, 1
      %s319 = scalar_select %p318, %s21, 1
      %s320 = smul.addr %s319, 16
      %s321 = smul.addr %s320, 4
      %s322 = scalar_lea.vmem %s0, %s321
      %p323 = pneg %p42
      %p324 = pneg %p39
      %p325 = pneg %p63
      %p326 = pneg %p60
      %p327 = pneg %p84
      %p328 = pneg %p81
      %p329 = pneg %p105
      %p330 = pneg %p102
      %p331 = pneg %p126
      %p332 = pneg %p123
      %p333 = pneg %p147
      %p334 = pneg %p144
      %p335 = pneg %p168
      %p336 = pneg %p165
      %p337 = pneg %p189
      %p338 = pneg %p186
      %p339 = pneg %p210
      %p340 = pneg %p207
      %p341 = pneg %p231
      %p342 = pneg %p228
      %p343 = pneg %p257
      %p344 = pneg %p254
      %p345 = scmp.lt.s32.totalorder %s21, 1
      %s346 = scalar_select %p345, %s21, 1
      %s347 = smul.addr %s346, 2
      %s348 = smul.addr %s347, 2
      %s349 = scalar_lea.vmem %s10, %s348
      %p350 = scmp.lt.s32.totalorder %s21, 1
      %s351 = scalar_select %p350, %s21, 1
      %s352 = smul.addr %s351, 16
      %s353 = smul.addr %s352, 4
      %s354 = scalar_lea.vmem %s0, %s353
      %p355 = scmp.lt.s32.totalorder %s21, 1
      %s356 = scalar_select %p355, %s21, 1
      %s357 = smul.addr %s356, 2
      %s358 = smul.addr %s357, 2
      %s359 = scalar_lea.vmem %s10, %s358
      %v361 = vld [vmem:[%s354] sm:$0xff]
      %v362 = vld [vmem:[%s354 + $0x8] sm:$0xff]
      %v363 = vld [vmem:[%s354 + $0x10] sm:$0xff]
      %v364 = vld [vmem:[%s354 + $0x18] sm:$0xff]
      %v365 = vld [vmem:[%s354 + $0x20] sm:$0xff]
      %v366 = vld [vmem:[%s354 + $0x28] sm:$0xff]
      %v367 = vld [vmem:[%s354 + $0x30] sm:$0xff]
      %v368 = vld [vmem:[%s354 + $0x38] sm:$0xff]
      %v369 = vld [vmem:[%s2] sm:$0xf]
      %v370 = vld [vmem:[%s2 + $0x4] sm:$0xf]
      %v371 = vld [vmem:[%s2 + $0x8] sm:$0xf]
      %v372 = vld [vmem:[%s2 + $0xc] sm:$0xf]
      %v373 = vld [vmem:[%s2 + $0x10] sm:$0xf]
      %v374 = vld [vmem:[%s2 + $0x14] sm:$0xf]
      %v375 = vld [vmem:[%s2 + $0x18] sm:$0xf]
      %v376 = vld [vmem:[%s2 + $0x1c] sm:$0xf]
      %v377 = vld [vmem:[%s2 + $0x20] sm:$0xf]
      %v378 = vld [vmem:[%s2 + $0x24] sm:$0xf]
      %v379 = vld [vmem:[%s2 + $0x28] sm:$0xf]
      %v380 = vld [vmem:[%s2 + $0x2c] sm:$0xf]
      %v381 = vld [vmem:[%s2 + $0x30] sm:$0xf]
      %v382 = vld [vmem:[%s2 + $0x34] sm:$0xf]
      %v383 = vld [vmem:[%s2 + $0x38] sm:$0xf]
      %v384 = vld [vmem:[%s2 + $0x3c] sm:$0xf]
      %v385 = vld [vmem:[%s2 + $0x40] sm:$0xf]
      %v386 = vld [vmem:[%s2 + $0x44] sm:$0xf]
      %v405 = vunpack.c.l.b16 %v369
      %v406 = vunpack.c.l.b16 %v370
      %v407 = vunpack.c.l.b16 %v371
      %v408 = vunpack.c.l.b16 %v372
      %v409 = vunpack.c.l.b16 %v373
      %v410 = vunpack.c.l.b16 %v374
      %v411 = vunpack.c.l.b16 %v375
      %v412 = vunpack.c.l.b16 %v376
      %v413 = vunpack.c.l.b16 %v377
      %v414 = vunpack.c.l.b16 %v378
      %v415 = vunpack.c.l.b16 %v379
      %v416 = vunpack.c.l.b16 %v380
      %v417 = vunpack.c.l.b16 %v381
      %v418 = vunpack.c.l.b16 %v382
      %v419 = vunpack.c.l.b16 %v383
      %v420 = vunpack.c.l.b16 %v384
      %v421 = vunpack.c.l.b16 %v385
      %v422 = vunpack.c.l.b16 %v386
      %v423 = vpack.c.b16 %v406, %v405
      %v424 = vpack.c.b16 %v408, %v407
      %v425 = vpack.c.b16 %v410, %v409
      %v426 = vpack.c.b16 %v412, %v411
      %v427 = vpack.c.b16 %v414, %v413
      %v428 = vpack.c.b16 %v416, %v415
      %v429 = vpack.c.b16 %v418, %v417
      %v430 = vpack.c.b16 %v420, %v419
      %v431 = vpack.c.b16 %v422, %v421
      %v440 = vunpack.c.l.b16 %v361
      %v441 = vunpack.c.h.b16 %v361
      %v442 = vunpack.c.l.b16 %v362
      %v443 = vunpack.c.h.b16 %v362
      %v444 = vunpack.c.l.b16 %v363
      %v445 = vunpack.c.h.b16 %v363
      %v446 = vunpack.c.l.b16 %v364
      %v447 = vunpack.c.h.b16 %v364
      %v448 = vunpack.c.l.b16 %v365
      %v449 = vunpack.c.h.b16 %v365
      %v450 = vunpack.c.l.b16 %v366
      %v451 = vunpack.c.h.b16 %v366
      %v452 = vunpack.c.l.b16 %v367
      %v453 = vunpack.c.h.b16 %v367
      %v454 = vunpack.c.l.b16 %v368
      %v455 = vunpack.c.h.b16 %v368
      %v456 = vpack.c.b16 %v442, %v440
      %v457 = vpack.c.b16 %v443, %v441
      %v458 = vpack.c.b16 %v446, %v444
      %v459 = vpack.c.b16 %v447, %v445
      %v460 = vpack.c.b16 %v450, %v448
      %v461 = vpack.c.b16 %v451, %v449
      %v462 = vpack.c.b16 %v454, %v452
      %v463 = vpack.c.b16 %v455, %v453
      %vm472 = vcmask 523264
      %v474 = vsel %vm472, %v423, 0
      %v477 = vsel %vm472, %v424, 0
      %v480 = vsel %vm472, %v425, 0
      %v483 = vsel %vm472, %v426, 0
      %v486 = vsel %vm472, %v427, 0
      %v489 = vsel %vm472, %v428, 0
      %v492 = vsel %vm472, %v429, 0
      %v495 = vsel %vm472, %v430, 0
      %v498 = vsel %vm472, %v431, 0
      %500 = vmatpush.bf16.msra.mxu0 0
      %501 = vmatpush.bf16.msra.mxu0 0
      %502 = vmatpush.bf16.msra.mxu0 0
      %503 = vmatpush.bf16.msra.mxu0 0
      %504 = vmatpush.bf16.msra.mxu0 %v462
      %505 = vmatpush.bf16.msra.mxu0 %v460
      %506 = vmatpush.bf16.msra.mxu0 %v458
      %507 = vmatpush.bf16.msra.mxu0 %v456
      %508 = vmatmul.bf16.gmra.mxu0 %v474
      %v509 = vpop.f32.mrf.mxu0
      %v510 = vadd.f32 0.0, %v509
      %v511 = vpop.f32.mrf.mxu0
      %v512 = vadd.f32 0.0, %v511
      %513 = vmatmul.bf16.gmra.mxu0 %v477
      %v514 = vpop.f32.mrf.mxu0
      %v515 = vadd.f32 0.0, %v514
      %v516 = vpop.f32.mrf.mxu0
      %v517 = vadd.f32 0.0, %v516
      %518 = vmatmul.bf16.gmra.mxu0 %v480
      %v519 = vpop.f32.mrf.mxu0
      %v520 = vadd.f32 0.0, %v519
      %v521 = vpop.f32.mrf.mxu0
      %v522 = vadd.f32 0.0, %v521
      %523 = vmatmul.bf16.gmra.mxu0 %v483
      %v524 = vpop.f32.mrf.mxu0
      %v525 = vadd.f32 0.0, %v524
      %v526 = vpop.f32.mrf.mxu0
      %v527 = vadd.f32 0.0, %v526
      %528 = vmatmul.bf16.gmra.mxu0 %v486
      %v529 = vpop.f32.mrf.mxu0
      %v530 = vadd.f32 0.0, %v529
      %v531 = vpop.f32.mrf.mxu0
      %v532 = vadd.f32 0.0, %v531
      %533 = vmatmul.bf16.gmra.mxu0 %v489
      %v534 = vpop.f32.mrf.mxu0
      %v535 = vadd.f32 0.0, %v534
      %v536 = vpop.f32.mrf.mxu0
      %v537 = vadd.f32 0.0, %v536
      %538 = vmatmul.bf16.gmra.mxu0 %v492
      %v539 = vpop.f32.mrf.mxu0
      %v540 = vadd.f32 0.0, %v539
      %v541 = vpop.f32.mrf.mxu0
      %v542 = vadd.f32 0.0, %v541
      %543 = vmatmul.bf16.gmra.mxu0 %v495
      %v544 = vpop.f32.mrf.mxu0
      %v545 = vadd.f32 0.0, %v544
      %v546 = vpop.f32.mrf.mxu0
      %v547 = vadd.f32 0.0, %v546
      %548 = vmatmul.bf16.gmra.mxu0 %v498
      %v549 = vpop.f32.mrf.mxu0
      %v550 = vadd.f32 0.0, %v549
      %v551 = vpop.f32.mrf.mxu0
      %v552 = vadd.f32 0.0, %v551
      %553 = vdwg.mxu0
      %554 = vmatpush.bf16.msra.mxu0 0
      %555 = vmatpush.bf16.msra.mxu0 0
      %556 = vmatpush.bf16.msra.mxu0 0
      %557 = vmatpush.bf16.msra.mxu0 0
      %558 = vmatpush.bf16.msra.mxu0 %v463
      %559 = vmatpush.bf16.msra.mxu0 %v461
      %560 = vmatpush.bf16.msra.mxu0 %v459
      %561 = vmatpush.bf16.msra.mxu0 %v457
      %562 = vmatmul.bf16.gmra.mxu0 %v474
      %v563 = vpop.f32.mrf.mxu0
      %v564 = vadd.f32 0.0, %v563
      %v565 = vpop.f32.mrf.mxu0
      %v566 = vadd.f32 0.0, %v565
      %567 = vmatmul.bf16.gmra.mxu0 %v477
      %v568 = vpop.f32.mrf.mxu0
      %v569 = vadd.f32 0.0, %v568
      %v570 = vpop.f32.mrf.mxu0
      %v571 = vadd.f32 0.0, %v570
      %572 = vmatmul.bf16.gmra.mxu0 %v480
      %v573 = vpop.f32.mrf.mxu0
      %v574 = vadd.f32 0.0, %v573
      %v575 = vpop.f32.mrf.mxu0
      %v576 = vadd.f32 0.0, %v575
      %577 = vmatmul.bf16.gmra.mxu0 %v483
      %v578 = vpop.f32.mrf.mxu0
      %v579 = vadd.f32 0.0, %v578
      %v580 = vpop.f32.mrf.mxu0
      %v581 = vadd.f32 0.0, %v580
      %582 = vmatmul.bf16.gmra.mxu0 %v486
      %v583 = vpop.f32.mrf.mxu0
      %v584 = vadd.f32 0.0, %v583
      %v585 = vpop.f32.mrf.mxu0
      %v586 = vadd.f32 0.0, %v585
      %587 = vmatmul.bf16.gmra.mxu0 %v489
      %v588 = vpop.f32.mrf.mxu0
      %v589 = vadd.f32 0.0, %v588
      %v590 = vpop.f32.mrf.mxu0
      %v591 = vadd.f32 0.0, %v590
      %592 = vmatmul.bf16.gmra.mxu0 %v492
      %v593 = vpop.f32.mrf.mxu0
      %v594 = vadd.f32 0.0, %v593
      %v595 = vpop.f32.mrf.mxu0
      %v596 = vadd.f32 0.0, %v595
      %597 = vmatmul.bf16.gmra.mxu0 %v495
      %v598 = vpop.f32.mrf.mxu0
      %v599 = vadd.f32 0.0, %v598
      %v600 = vpop.f32.mrf.mxu0
      %v601 = vadd.f32 0.0, %v600
      %602 = vmatmul.bf16.gmra.mxu0 %v498
      %v603 = vpop.f32.mrf.mxu0
      %v604 = vadd.f32 0.0, %v603
      %v605 = vpop.f32.mrf.mxu0
      %v606 = vadd.f32 0.0, %v605
      %607 = vdwg.mxu0
      %608 = vrot.lane.b32.xlu0 %v510, 17
      %v609 = vpop.permute.xlu0 %608
      %610 = vrot.lane.b32.xlu0 %v512, 17
      %v611 = vpop.permute.xlu0 %610
      %612 = vrot.lane.b32.xlu0 %v564, 17
      %v613 = vpop.permute.xlu0 %612
      %614 = vrot.lane.b32.xlu0 %v566, 17
      %v615 = vpop.permute.xlu0 %614
      %v616 = vlaneseq
      %v617 = vand.u32 %v616, 127
      %vm618 = vcmp.lt.s32.totalorder %v617, 17
      %v619 = vsel %vm618, %v609, %v613
      %v620 = vsel %vm618, %v611, %v615
      %v621 = vsel %vm618, %v613, %v609
      %v622 = vsel %vm618, %v615, %v611
      %v623 = vld [vmem:[%s1] ss:$8 sm:$0x3]
      %v625 = vperm.slane %v623, 0
      %v626 = vperm.slane %v623, 1
      %v629 = vmul.f32 %v621, %v625
      %v630 = vmul.f32 %v619, %v626
      %v631 = vmul.f32 %v622, %v625
      %v632 = vmul.f32 %v620, %v626
      %v633 = vadd.f32 %v530, %v629
      %v634 = vadd.f32 %v584, %v630
      %v635 = vadd.f32 %v532, %v631
      %v636 = vadd.f32 %v586, %v632
      %637 = vrot.lane.b32.xlu0 %v515, 16
      %v638 = vpop.permute.xlu0 %637
      %639 = vrot.lane.b32.xlu0 %v517, 16
      %v640 = vpop.permute.xlu0 %639
      %641 = vrot.lane.b32.xlu0 %v569, 16
      %v642 = vpop.permute.xlu0 %641
      %643 = vrot.lane.b32.xlu0 %v571, 16
      %v644 = vpop.permute.xlu0 %643
      %vm645 = vcmp.lt.s32.totalorder %v617, 16
      %v646 = vsel %vm645, %v638, %v642
      %v647 = vsel %vm645, %v640, %v644
      %v648 = vsel %vm645, %v642, %v638
      %v649 = vsel %vm645, %v644, %v640
      %s650 = scalar_lea.vmem %s1, 1
      %v651 = vld [vmem:[%s650] ss:$8 sm:$0x3]
      %v653 = vperm.slane %v651, 0
      %v654 = vperm.slane %v651, 1
      %v657 = vmul.f32 %v648, %v653
      %v658 = vmul.f32 %v646, %v654
      %v659 = vmul.f32 %v649, %v653
      %v660 = vmul.f32 %v647, %v654
      %v661 = vadd.f32 %v633, %v657
      %v662 = vadd.f32 %v634, %v658
      %v663 = vadd.f32 %v635, %v659
      %v664 = vadd.f32 %v636, %v660
      %665 = vrot.lane.b32.xlu0 %v520, 15
      %v666 = vpop.permute.xlu0 %665
      %667 = vrot.lane.b32.xlu0 %v522, 15
      %v668 = vpop.permute.xlu0 %667
      %669 = vrot.lane.b32.xlu0 %v574, 15
      %v670 = vpop.permute.xlu0 %669
      %671 = vrot.lane.b32.xlu0 %v576, 15
      %v672 = vpop.permute.xlu0 %671
      %vm673 = vcmp.lt.s32.totalorder %v617, 15
      %v674 = vsel %vm673, %v666, %v670
      %v675 = vsel %vm673, %v668, %v672
      %v676 = vsel %vm673, %v670, %v666
      %v677 = vsel %vm673, %v672, %v668
      %s678 = scalar_lea.vmem %s1, 2
      %v679 = vld [vmem:[%s678] ss:$8 sm:$0x3]
      %v681 = vperm.slane %v679, 0
      %v682 = vperm.slane %v679, 1
      %v685 = vmul.f32 %v676, %v681
      %v686 = vmul.f32 %v674, %v682
      %v687 = vmul.f32 %v677, %v681
      %v688 = vmul.f32 %v675, %v682
      %v689 = vadd.f32 %v661, %v685
      %v690 = vadd.f32 %v662, %v686
      %v691 = vadd.f32 %v663, %v687
      %v692 = vadd.f32 %v664, %v688
      %693 = vrot.lane.b32.xlu0 %v525, 1
      %v694 = vpop.permute.xlu0 %693
      %695 = vrot.lane.b32.xlu0 %v527, 1
      %v696 = vpop.permute.xlu0 %695
      %697 = vrot.lane.b32.xlu0 %v579, 1
      %v698 = vpop.permute.xlu0 %697
      %699 = vrot.lane.b32.xlu0 %v581, 1
      %v700 = vpop.permute.xlu0 %699
      %vm701 = vcmp.lt.s32.totalorder %v617, 1
      %v702 = vsel %vm701, %v694, %v698
      %v703 = vsel %vm701, %v696, %v700
      %v704 = vsel %vm701, %v698, %v694
      %v705 = vsel %vm701, %v700, %v696
      %s706 = scalar_lea.vmem %s1, 3
      %v707 = vld [vmem:[%s706] ss:$8 sm:$0x3]
      %v709 = vperm.slane %v707, 0
      %v710 = vperm.slane %v707, 1
      %v713 = vmul.f32 %v704, %v709
      %v714 = vmul.f32 %v702, %v710
      %v715 = vmul.f32 %v705, %v709
      %v716 = vmul.f32 %v703, %v710
      %v717 = vadd.f32 %v689, %v713
      %v718 = vadd.f32 %v690, %v714
      %v719 = vadd.f32 %v691, %v715
      %v720 = vadd.f32 %v692, %v716
      %721 = vrot.lane.b32.xlu0 %v535, 127
      %v722 = vpop.permute.xlu0 %721
      %723 = vrot.lane.b32.xlu0 %v537, 127
      %v724 = vpop.permute.xlu0 %723
      %725 = vrot.lane.b32.xlu0 %v589, 127
      %v726 = vpop.permute.xlu0 %725
      %727 = vrot.lane.b32.xlu0 %v591, 127
      %v728 = vpop.permute.xlu0 %727
      %vm729 = vcmp.lt.s32.totalorder %v617, 127
      %v730 = vsel %vm729, %v722, %v726
      %v731 = vsel %vm729, %v724, %v728
      %v732 = vsel %vm729, %v726, %v722
      %v733 = vsel %vm729, %v728, %v724
      %s734 = scalar_lea.vmem %s1, 5
      %v735 = vld [vmem:[%s734] ss:$8 sm:$0x3]
      %v737 = vperm.slane %v735, 0
      %v738 = vperm.slane %v735, 1
      %v741 = vmul.f32 %v730, %v737
      %v742 = vmul.f32 %v732, %v738
      %v743 = vmul.f32 %v731, %v737
      %v744 = vmul.f32 %v733, %v738
      %v745 = vadd.f32 %v717, %v741
      %v746 = vadd.f32 %v718, %v742
      %v747 = vadd.f32 %v719, %v743
      %v748 = vadd.f32 %v720, %v744
      %749 = vrot.lane.b32.xlu0 %v540, 113
      %v750 = vpop.permute.xlu0 %749
      %751 = vrot.lane.b32.xlu0 %v542, 113
      %v752 = vpop.permute.xlu0 %751
      %753 = vrot.lane.b32.xlu0 %v594, 113
      %v754 = vpop.permute.xlu0 %753
      %755 = vrot.lane.b32.xlu0 %v596, 113
      %v756 = vpop.permute.xlu0 %755
      %vm757 = vcmp.lt.s32.totalorder %v617, 113
      %v758 = vsel %vm757, %v750, %v754
      %v759 = vsel %vm757, %v752, %v756
      %v760 = vsel %vm757, %v754, %v750
      %v761 = vsel %vm757, %v756, %v752
      %s762 = scalar_lea.vmem %s1, 6
      %v763 = vld [vmem:[%s762] ss:$8 sm:$0x3]
      %v765 = vperm.slane %v763, 0
      %v766 = vperm.slane %v763, 1
      %v769 = vmul.f32 %v758, %v765
      %v770 = vmul.f32 %v760, %v766
      %v771 = vmul.f32 %v759, %v765
      %v772 = vmul.f32 %v761, %v766
      %v773 = vadd.f32 %v745, %v769
      %v774 = vadd.f32 %v746, %v770
      %v775 = vadd.f32 %v747, %v771
      %v776 = vadd.f32 %v748, %v772
      %777 = vrot.lane.b32.xlu0 %v545, 112
      %v778 = vpop.permute.xlu0 %777
      %779 = vrot.lane.b32.xlu0 %v547, 112
      %v780 = vpop.permute.xlu0 %779
      %781 = vrot.lane.b32.xlu0 %v599, 112
      %v782 = vpop.permute.xlu0 %781
      %783 = vrot.lane.b32.xlu0 %v601, 112
      %v784 = vpop.permute.xlu0 %783
      %vm785 = vcmp.lt.s32.totalorder %v617, 112
      %v786 = vsel %vm785, %v778, %v782
      %v787 = vsel %vm785, %v780, %v784
      %v788 = vsel %vm785, %v782, %v778
      %v789 = vsel %vm785, %v784, %v780
      %s790 = scalar_lea.vmem %s1, 7
      %v791 = vld [vmem:[%s790] ss:$8 sm:$0x3]
      %v793 = vperm.slane %v791, 0
      %v794 = vperm.slane %v791, 1
      %v797 = vmul.f32 %v786, %v793
      %v798 = vmul.f32 %v788, %v794
      %v799 = vmul.f32 %v787, %v793
      %v800 = vmul.f32 %v789, %v794
      %v801 = vadd.f32 %v773, %v797
      %v802 = vadd.f32 %v774, %v798
      %v803 = vadd.f32 %v775, %v799
      %v804 = vadd.f32 %v776, %v800
      %805 = vrot.lane.b32.xlu0 %v550, 111
      %v806 = vpop.permute.xlu0 %805
      %807 = vrot.lane.b32.xlu0 %v552, 111
      %v808 = vpop.permute.xlu0 %807
      %809 = vrot.lane.b32.xlu0 %v604, 111
      %v810 = vpop.permute.xlu0 %809
      %811 = vrot.lane.b32.xlu0 %v606, 111
      %v812 = vpop.permute.xlu0 %811
      %vm813 = vcmp.lt.s32.totalorder %v617, 111
      %v814 = vsel %vm813, %v806, %v810
      %v815 = vsel %vm813, %v808, %v812
      %v816 = vsel %vm813, %v810, %v806
      %v817 = vsel %vm813, %v812, %v808
      %s818 = scalar_lea.vmem %s1, 16
      %v819 = vld [vmem:[%s818] ss:$8 sm:$0x3]
      %v821 = vperm.slane %v819, 0
      %v822 = vperm.slane %v819, 1
      %v825 = vmul.f32 %v814, %v821
      %v826 = vmul.f32 %v816, %v822
      %v827 = vmul.f32 %v815, %v821
      %v828 = vmul.f32 %v817, %v822
      %v829 = vadd.f32 %v801, %v825
      %v830 = vadd.f32 %v802, %v826
      %v831 = vadd.f32 %v803, %v827
      %v832 = vadd.f32 %v804, %v828
      %v833 = vld [vmem:[%s3] sm:$0xff]
      %v834 = vld [vmem:[%s3 + $0x8] sm:$0xff]
      %836 = vset.pattern.permute.xlu0 0
      %837 = vperm.xlu0 %836, %v833
      %v838 = vpop.permute.xlu0 %837
      %841 = vset.pattern.permute.xlu0 0
      %842 = vperm.xlu0 %841, %v834
      %v843 = vpop.permute.xlu0 %842
      %v845 = vadd.f32 %v829, %v838
      %v846 = vadd.f32 %v830, %v838
      %v847 = vadd.f32 %v831, %v843
      %v848 = vadd.f32 %v832, %v843
      %v849 = vmul.f32 %v845, 0.2
      %v850 = vmul.f32 %v846, 0.2
      %v851 = vmul.f32 %v847, 0.2
      %v852 = vmul.f32 %v848, 0.2
      %v853 = vmax.f32 %v845, %v849
      %v854 = vmax.f32 %v846, %v850
      %v855 = vmax.f32 %v847, %v851
      %v856 = vmax.f32 %v848, %v852
      %v857 = vpack.c.bf16 %v855, %v853
      %v858 = vpack.c.bf16 %v856, %v854
      %v859 = vld [vmem:[%s4] sm:$0xf]
      %v860 = vld [vmem:[%s4 + $0x4] sm:$0xf]
      %v861 = vld [vmem:[%s4 + $0x8] sm:$0xf]
      %v862 = vld [vmem:[%s4 + $0xc] sm:$0xf]
      %v863 = vld [vmem:[%s4 + $0x10] sm:$0xf]
      %v864 = vld [vmem:[%s4 + $0x14] sm:$0xf]
      %v865 = vld [vmem:[%s4 + $0x18] sm:$0xf]
      %v866 = vld [vmem:[%s4 + $0x1c] sm:$0xf]
      %v867 = vld [vmem:[%s4 + $0x20] sm:$0xf]
      %v868 = vld [vmem:[%s4 + $0x24] sm:$0xf]
      %v869 = vld [vmem:[%s4 + $0x28] sm:$0xf]
      %v870 = vld [vmem:[%s4 + $0x2c] sm:$0xf]
      %v871 = vld [vmem:[%s4 + $0x30] sm:$0xf]
      %v872 = vld [vmem:[%s4 + $0x34] sm:$0xf]
      %v873 = vld [vmem:[%s4 + $0x38] sm:$0xf]
      %v874 = vld [vmem:[%s4 + $0x3c] sm:$0xf]
      %v875 = vld [vmem:[%s4 + $0x40] sm:$0xf]
      %v876 = vld [vmem:[%s4 + $0x44] sm:$0xf]
      %v895 = vunpack.c.l.b16 %v859
      %v896 = vunpack.c.l.b16 %v860
      %v897 = vunpack.c.l.b16 %v861
      %v898 = vunpack.c.l.b16 %v862
      %v899 = vunpack.c.l.b16 %v863
      %v900 = vunpack.c.l.b16 %v864
      %v901 = vunpack.c.l.b16 %v865
      %v902 = vunpack.c.l.b16 %v866
      %v903 = vunpack.c.l.b16 %v867
      %v904 = vunpack.c.l.b16 %v868
      %v905 = vunpack.c.l.b16 %v869
      %v906 = vunpack.c.l.b16 %v870
      %v907 = vunpack.c.l.b16 %v871
      %v908 = vunpack.c.l.b16 %v872
      %v909 = vunpack.c.l.b16 %v873
      %v910 = vunpack.c.l.b16 %v874
      %v911 = vunpack.c.l.b16 %v875
      %v912 = vunpack.c.l.b16 %v876
      %v913 = vpack.c.b16 %v896, %v895
      %v914 = vpack.c.b16 %v898, %v897
      %v915 = vpack.c.b16 %v900, %v899
      %v916 = vpack.c.b16 %v902, %v901
      %v917 = vpack.c.b16 %v904, %v903
      %v918 = vpack.c.b16 %v906, %v905
      %v919 = vpack.c.b16 %v908, %v907
      %v920 = vpack.c.b16 %v910, %v909
      %v921 = vpack.c.b16 %v912, %v911
      %vm922 = vcmask 130048
      %v924 = vsel %vm922, %v913, 0
      %v927 = vsel %vm922, %v914, 0
      %v930 = vsel %vm922, %v915, 0
      %v933 = vsel %vm922, %v916, 0
      %v936 = vsel %vm922, %v917, 0
      %v939 = vsel %vm922, %v918, 0
      %v942 = vsel %vm922, %v919, 0
      %v945 = vsel %vm922, %v920, 0
      %v948 = vsel %vm922, %v921, 0
      %950 = vmatpush.bf16.msra.mxu0 0
      %951 = vmatpush.bf16.msra.mxu0 0
      %952 = vmatpush.bf16.msra.mxu0 0
      %953 = vmatpush.bf16.msra.mxu0 0
      %954 = vmatpush.bf16.msra.mxu0 0
      %955 = vmatpush.bf16.msra.mxu0 0
      %956 = vmatpush.bf16.msra.mxu0 0
      %957 = vmatpush.bf16.msra.mxu0 %v857
      %958 = vmatmul.bf16.gmra.mxu0 %v924
      %v959 = vpop.f32.mrf.mxu0
      %v960 = vadd.f32 0.0, %v959
      %v961 = vpop.f32.mrf.mxu0
      %v962 = vadd.f32 0.0, %v961
      %963 = vmatmul.bf16.gmra.mxu0 %v927
      %v964 = vpop.f32.mrf.mxu0
      %v965 = vadd.f32 0.0, %v964
      %v966 = vpop.f32.mrf.mxu0
      %v967 = vadd.f32 0.0, %v966
      %968 = vmatmul.bf16.gmra.mxu0 %v930
      %v969 = vpop.f32.mrf.mxu0
      %v970 = vadd.f32 0.0, %v969
      %v971 = vpop.f32.mrf.mxu0
      %v972 = vadd.f32 0.0, %v971
      %973 = vmatmul.bf16.gmra.mxu0 %v933
      %v974 = vpop.f32.mrf.mxu0
      %v975 = vadd.f32 0.0, %v974
      %v976 = vpop.f32.mrf.mxu0
      %v977 = vadd.f32 0.0, %v976
      %978 = vmatmul.bf16.gmra.mxu0 %v936
      %v979 = vpop.f32.mrf.mxu0
      %v980 = vadd.f32 0.0, %v979
      %v981 = vpop.f32.mrf.mxu0
      %v982 = vadd.f32 0.0, %v981
      %983 = vmatmul.bf16.gmra.mxu0 %v939
      %v984 = vpop.f32.mrf.mxu0
      %v985 = vadd.f32 0.0, %v984
      %v986 = vpop.f32.mrf.mxu0
      %v987 = vadd.f32 0.0, %v986
      %988 = vmatmul.bf16.gmra.mxu0 %v942
      %v989 = vpop.f32.mrf.mxu0
      %v990 = vadd.f32 0.0, %v989
      %v991 = vpop.f32.mrf.mxu0
      %v992 = vadd.f32 0.0, %v991
      %993 = vmatmul.bf16.gmra.mxu0 %v945
      %v994 = vpop.f32.mrf.mxu0
      %v995 = vadd.f32 0.0, %v994
      %v996 = vpop.f32.mrf.mxu0
      %v997 = vadd.f32 0.0, %v996
      %998 = vmatmul.bf16.gmra.mxu0 %v948
      %v999 = vpop.f32.mrf.mxu0
      %v1000 = vadd.f32 0.0, %v999
      %v1001 = vpop.f32.mrf.mxu0
      %v1002 = vadd.f32 0.0, %v1001
      %1003 = vdwg.mxu0
      %1004 = vmatpush.bf16.msra.mxu0 0
      %1005 = vmatpush.bf16.msra.mxu0 0
      %1006 = vmatpush.bf16.msra.mxu0 0
      %1007 = vmatpush.bf16.msra.mxu0 0
      %1008 = vmatpush.bf16.msra.mxu0 0
      %1009 = vmatpush.bf16.msra.mxu0 0
      %1010 = vmatpush.bf16.msra.mxu0 0
      %1011 = vmatpush.bf16.msra.mxu0 %v858
      %1012 = vmatmul.bf16.gmra.mxu0 %v924
      %v1013 = vpop.f32.mrf.mxu0
      %v1014 = vadd.f32 0.0, %v1013
      %v1015 = vpop.f32.mrf.mxu0
      %v1016 = vadd.f32 0.0, %v1015
      %1017 = vmatmul.bf16.gmra.mxu0 %v927
      %v1018 = vpop.f32.mrf.mxu0
      %v1019 = vadd.f32 0.0, %v1018
      %v1020 = vpop.f32.mrf.mxu0
      %v1021 = vadd.f32 0.0, %v1020
      %1022 = vmatmul.bf16.gmra.mxu0 %v930
      %v1023 = vpop.f32.mrf.mxu0
      %v1024 = vadd.f32 0.0, %v1023
      %v1025 = vpop.f32.mrf.mxu0
      %v1026 = vadd.f32 0.0, %v1025
      %1027 = vmatmul.bf16.gmra.mxu0 %v933
      %v1028 = vpop.f32.mrf.mxu0
      %v1029 = vadd.f32 0.0, %v1028
      %v1030 = vpop.f32.mrf.mxu0
      %v1031 = vadd.f32 0.0, %v1030
      %1032 = vmatmul.bf16.gmra.mxu0 %v936
      %v1033 = vpop.f32.mrf.mxu0
      %v1034 = vadd.f32 0.0, %v1033
      %v1035 = vpop.f32.mrf.mxu0
      %v1036 = vadd.f32 0.0, %v1035
      %1037 = vmatmul.bf16.gmra.mxu0 %v939
      %v1038 = vpop.f32.mrf.mxu0
      %v1039 = vadd.f32 0.0, %v1038
      %v1040 = vpop.f32.mrf.mxu0
      %v1041 = vadd.f32 0.0, %v1040
      %1042 = vmatmul.bf16.gmra.mxu0 %v942
      %v1043 = vpop.f32.mrf.mxu0
      %v1044 = vadd.f32 0.0, %v1043
      %v1045 = vpop.f32.mrf.mxu0
      %v1046 = vadd.f32 0.0, %v1045
      %1047 = vmatmul.bf16.gmra.mxu0 %v945
      %v1048 = vpop.f32.mrf.mxu0
      %v1049 = vadd.f32 0.0, %v1048
      %v1050 = vpop.f32.mrf.mxu0
      %v1051 = vadd.f32 0.0, %v1050
      %1052 = vmatmul.bf16.gmra.mxu0 %v948
      %v1053 = vpop.f32.mrf.mxu0
      %v1054 = vadd.f32 0.0, %v1053
      %v1055 = vpop.f32.mrf.mxu0
      %v1056 = vadd.f32 0.0, %v1055
      %1057 = vdwg.mxu0
      %1058 = vrot.lane.b32.xlu0 %v960, 17
      %v1059 = vpop.permute.xlu0 %1058
      %1060 = vrot.lane.b32.xlu0 %v962, 17
      %v1061 = vpop.permute.xlu0 %1060
      %1062 = vrot.lane.b32.xlu0 %v1014, 17
      %v1063 = vpop.permute.xlu0 %1062
      %1064 = vrot.lane.b32.xlu0 %v1016, 17
      %v1065 = vpop.permute.xlu0 %1064
      %v1066 = vsel %vm618, %v1059, %v1063
      %v1067 = vsel %vm618, %v1061, %v1065
      %v1068 = vsel %vm618, %v1063, %v1059
      %v1069 = vsel %vm618, %v1065, %v1061
      %v1070 = vmul.f32 %v1068, %v625
      %v1071 = vmul.f32 %v1066, %v626
      %v1072 = vmul.f32 %v1069, %v625
      %v1073 = vmul.f32 %v1067, %v626
      %v1074 = vadd.f32 %v980, %v1070
      %v1075 = vadd.f32 %v1034, %v1071
      %v1076 = vadd.f32 %v982, %v1072
      %v1077 = vadd.f32 %v1036, %v1073
      %1078 = vrot.lane.b32.xlu0 %v965, 16
      %v1079 = vpop.permute.xlu0 %1078
      %1080 = vrot.lane.b32.xlu0 %v967, 16
      %v1081 = vpop.permute.xlu0 %1080
      %1082 = vrot.lane.b32.xlu0 %v1019, 16
      %v1083 = vpop.permute.xlu0 %1082
      %1084 = vrot.lane.b32.xlu0 %v1021, 16
      %v1085 = vpop.permute.xlu0 %1084
      %v1086 = vsel %vm645, %v1079, %v1083
      %v1087 = vsel %vm645, %v1081, %v1085
      %v1088 = vsel %vm645, %v1083, %v1079
      %v1089 = vsel %vm645, %v1085, %v1081
      %v1090 = vmul.f32 %v1088, %v653
      %v1091 = vmul.f32 %v1086, %v654
      %v1092 = vmul.f32 %v1089, %v653
      %v1093 = vmul.f32 %v1087, %v654
      %v1094 = vadd.f32 %v1074, %v1090
      %v1095 = vadd.f32 %v1075, %v1091
      %v1096 = vadd.f32 %v1076, %v1092
      %v1097 = vadd.f32 %v1077, %v1093
      %1098 = vrot.lane.b32.xlu0 %v970, 15
      %v1099 = vpop.permute.xlu0 %1098
      %1100 = vrot.lane.b32.xlu0 %v972, 15
      %v1101 = vpop.permute.xlu0 %1100
      %1102 = vrot.lane.b32.xlu0 %v1024, 15
      %v1103 = vpop.permute.xlu0 %1102
      %1104 = vrot.lane.b32.xlu0 %v1026, 15
      %v1105 = vpop.permute.xlu0 %1104
      %v1106 = vsel %vm673, %v1099, %v1103
      %v1107 = vsel %vm673, %v1101, %v1105
      %v1108 = vsel %vm673, %v1103, %v1099
      %v1109 = vsel %vm673, %v1105, %v1101
      %v1110 = vmul.f32 %v1108, %v681
      %v1111 = vmul.f32 %v1106, %v682
      %v1112 = vmul.f32 %v1109, %v681
      %v1113 = vmul.f32 %v1107, %v682
      %v1114 = vadd.f32 %v1094, %v1110
      %v1115 = vadd.f32 %v1095, %v1111
      %v1116 = vadd.f32 %v1096, %v1112
      %v1117 = vadd.f32 %v1097, %v1113
      %1118 = vrot.lane.b32.xlu0 %v975, 1
      %v1119 = vpop.permute.xlu0 %1118
      %1120 = vrot.lane.b32.xlu0 %v977, 1
      %v1121 = vpop.permute.xlu0 %1120
      %1122 = vrot.lane.b32.xlu0 %v1029, 1
      %v1123 = vpop.permute.xlu0 %1122
      %1124 = vrot.lane.b32.xlu0 %v1031, 1
      %v1125 = vpop.permute.xlu0 %1124
      %v1126 = vsel %vm701, %v1119, %v1123
      %v1127 = vsel %vm701, %v1121, %v1125
      %v1128 = vsel %vm701, %v1123, %v1119
      %v1129 = vsel %vm701, %v1125, %v1121
      %v1130 = vmul.f32 %v1128, %v709
      %v1131 = vmul.f32 %v1126, %v710
      %v1132 = vmul.f32 %v1129, %v709
      %v1133 = vmul.f32 %v1127, %v710
      %v1134 = vadd.f32 %v1114, %v1130
      %v1135 = vadd.f32 %v1115, %v1131
      %v1136 = vadd.f32 %v1116, %v1132
      %v1137 = vadd.f32 %v1117, %v1133
      %1138 = vrot.lane.b32.xlu0 %v985, 127
      %v1139 = vpop.permute.xlu0 %1138
      %1140 = vrot.lane.b32.xlu0 %v987, 127
      %v1141 = vpop.permute.xlu0 %1140
      %1142 = vrot.lane.b32.xlu0 %v1039, 127
      %v1143 = vpop.permute.xlu0 %1142
      %1144 = vrot.lane.b32.xlu0 %v1041, 127
      %v1145 = vpop.permute.xlu0 %1144
      %v1146 = vsel %vm729, %v1139, %v1143
      %v1147 = vsel %vm729, %v1141, %v1145
      %v1148 = vsel %vm729, %v1143, %v1139
      %v1149 = vsel %vm729, %v1145, %v1141
      %v1150 = vmul.f32 %v1146, %v737
      %v1151 = vmul.f32 %v1148, %v738
      %v1152 = vmul.f32 %v1147, %v737
      %v1153 = vmul.f32 %v1149, %v738
      %v1154 = vadd.f32 %v1134, %v1150
      %v1155 = vadd.f32 %v1135, %v1151
      %v1156 = vadd.f32 %v1136, %v1152
      %v1157 = vadd.f32 %v1137, %v1153
      %1158 = vrot.lane.b32.xlu0 %v990, 113
      %v1159 = vpop.permute.xlu0 %1158
      %1160 = vrot.lane.b32.xlu0 %v992, 113
      %v1161 = vpop.permute.xlu0 %1160
      %1162 = vrot.lane.b32.xlu0 %v1044, 113
      %v1163 = vpop.permute.xlu0 %1162
      %1164 = vrot.lane.b32.xlu0 %v1046, 113
      %v1165 = vpop.permute.xlu0 %1164
      %v1166 = vsel %vm757, %v1159, %v1163
      %v1167 = vsel %vm757, %v1161, %v1165
      %v1168 = vsel %vm757, %v1163, %v1159
      %v1169 = vsel %vm757, %v1165, %v1161
      %v1170 = vmul.f32 %v1166, %v765
      %v1171 = vmul.f32 %v1168, %v766
      %v1172 = vmul.f32 %v1167, %v765
      %v1173 = vmul.f32 %v1169, %v766
      %v1174 = vadd.f32 %v1154, %v1170
      %v1175 = vadd.f32 %v1155, %v1171
      %v1176 = vadd.f32 %v1156, %v1172
      %v1177 = vadd.f32 %v1157, %v1173
      %1178 = vrot.lane.b32.xlu0 %v995, 112
      %v1179 = vpop.permute.xlu0 %1178
      %1180 = vrot.lane.b32.xlu0 %v997, 112
      %v1181 = vpop.permute.xlu0 %1180
      %1182 = vrot.lane.b32.xlu0 %v1049, 112
      %v1183 = vpop.permute.xlu0 %1182
      %1184 = vrot.lane.b32.xlu0 %v1051, 112
      %v1185 = vpop.permute.xlu0 %1184
      %v1186 = vsel %vm785, %v1179, %v1183
      %v1187 = vsel %vm785, %v1181, %v1185
      %v1188 = vsel %vm785, %v1183, %v1179
      %v1189 = vsel %vm785, %v1185, %v1181
      %v1190 = vmul.f32 %v1186, %v793
      %v1191 = vmul.f32 %v1188, %v794
      %v1192 = vmul.f32 %v1187, %v793
      %v1193 = vmul.f32 %v1189, %v794
      %v1194 = vadd.f32 %v1174, %v1190
      %v1195 = vadd.f32 %v1175, %v1191
      %v1196 = vadd.f32 %v1176, %v1192
      %v1197 = vadd.f32 %v1177, %v1193
      %1198 = vrot.lane.b32.xlu0 %v1000, 111
      %v1199 = vpop.permute.xlu0 %1198
      %1200 = vrot.lane.b32.xlu0 %v1002, 111
      %v1201 = vpop.permute.xlu0 %1200
      %1202 = vrot.lane.b32.xlu0 %v1054, 111
      %v1203 = vpop.permute.xlu0 %1202
      %1204 = vrot.lane.b32.xlu0 %v1056, 111
      %v1205 = vpop.permute.xlu0 %1204
      %v1206 = vsel %vm813, %v1199, %v1203
      %v1207 = vsel %vm813, %v1201, %v1205
      %v1208 = vsel %vm813, %v1203, %v1199
      %v1209 = vsel %vm813, %v1205, %v1201
      %v1210 = vmul.f32 %v1206, %v821
      %v1211 = vmul.f32 %v1208, %v822
      %v1212 = vmul.f32 %v1207, %v821
      %v1213 = vmul.f32 %v1209, %v822
      %v1214 = vadd.f32 %v1194, %v1210
      %v1215 = vadd.f32 %v1195, %v1211
      %v1216 = vadd.f32 %v1196, %v1212
      %v1217 = vadd.f32 %v1197, %v1213
      %v1218 = vld [vmem:[%s5] sm:$0xff]
      %v1219 = vld [vmem:[%s5 + $0x8] sm:$0xff]
      %1221 = vset.pattern.permute.xlu0 0
      %1222 = vperm.xlu0 %1221, %v1218
      %v1223 = vpop.permute.xlu0 %1222
      %1226 = vset.pattern.permute.xlu0 0
      %1227 = vperm.xlu0 %1226, %v1219
      %v1228 = vpop.permute.xlu0 %1227
      %v1230 = vadd.f32 %v1214, %v1223
      %v1231 = vadd.f32 %v1215, %v1223
      %v1232 = vadd.f32 %v1216, %v1228
      %v1233 = vadd.f32 %v1217, %v1228
      %v1234 = vmul.f32 %v1230, 0.2
      %v1235 = vmul.f32 %v1231, 0.2
      %v1236 = vmul.f32 %v1232, 0.2
      %v1237 = vmul.f32 %v1233, 0.2
      %v1238 = vmax.f32 %v1230, %v1234
      %v1239 = vmax.f32 %v1231, %v1235
      %v1240 = vmax.f32 %v1232, %v1236
      %v1241 = vmax.f32 %v1233, %v1237
      %v1242 = vpack.c.bf16 %v1240, %v1238
      %v1243 = vpack.c.bf16 %v1241, %v1239
      %v1244 = vld [vmem:[%s6] sm:$0xf]
      %v1245 = vld [vmem:[%s7] sm:$0xff]
      %1247 = vset.pattern.permute.xlu0 0
      %1248 = vperm.xlu0 %1247, %v1245
      %v1249 = vpop.permute.xlu0 %1248
      %v1252 = vsel %vm922, %v1244, 0
      %1254 = vmatpush.bf16.msra.mxu0 0
      %1255 = vmatpush.bf16.msra.mxu0 0
      %1256 = vmatpush.bf16.msra.mxu0 0
      %1257 = vmatpush.bf16.msra.mxu0 0
      %1258 = vmatpush.bf16.msra.mxu0 0
      %1259 = vmatpush.bf16.msra.mxu0 0
      %1260 = vmatpush.bf16.msra.mxu0 0
      %1261 = vmatpush.bf16.msra.mxu0 %v1242
      %1262 = vmatmul.bf16.gmra.mxu0 %v1252
      %v1263 = vpop.f32.mrf.mxu0
      %v1264 = vadd.f32 %v1249, %v1263
      %v1265 = vpop.f32.mrf.mxu0
      %1266 = vdwg.mxu0
      %1267 = vmatpush.bf16.msra.mxu0 0
      %1268 = vmatpush.bf16.msra.mxu0 0
      %1269 = vmatpush.bf16.msra.mxu0 0
      %1270 = vmatpush.bf16.msra.mxu0 0
      %1271 = vmatpush.bf16.msra.mxu0 0
      %1272 = vmatpush.bf16.msra.mxu0 0
      %1273 = vmatpush.bf16.msra.mxu0 0
      %1274 = vmatpush.bf16.msra.mxu0 %v1243
      %1275 = vmatmul.bf16.gmra.mxu0 %v1252
      %v1276 = vpop.f32.mrf.mxu0
      %v1277 = vadd.f32 %v1249, %v1276
      %v1278 = vpop.f32.mrf.mxu0
      %1279 = vdwg.mxu0
      %v1280 = vmul.f32 %v1264, 0.2
      %v1281 = vmul.f32 %v1277, 0.2
      %v1282 = vmax.f32 %v1264, %v1280
      %v1283 = vmax.f32 %v1277, %v1281
      %v1284 = vpack.c.bf16 %v1282, %v1282
      %v1285 = vpack.c.bf16 %v1283, %v1283
      %v1286 = vld [vmem:[%s8] sm:$0x1]
      %v1287 = vld [vmem:[%s9] sm:$0x3]
      %1289 = vset.pattern.permute.xlu0 0
      %1290 = vperm.xlu0 %1289, %v1287
      %v1291 = vpop.permute.xlu0 %1290
      %vm1293 = vcmask 64512
      %v1295 = vsel %vm1293, %v1286, 0
      %vm1297 = vcmask 1043456
      %v1299 = vsel %vm1297, %v1284, 0
      %v1302 = vsel %vm1297, %v1285, 0
      %1304 = vmatpush.bf16.msra.mxu0 0
      %1305 = vmatpush.bf16.msra.mxu0 0
      %1306 = vmatpush.bf16.msra.mxu0 0
      %1307 = vmatpush.bf16.msra.mxu0 0
      %1308 = vmatpush.bf16.msra.mxu0 0
      %1309 = vmatpush.bf16.msra.mxu0 0
      %1310 = vmatpush.bf16.msra.mxu0 0
      %1311 = vmatpush.bf16.msra.mxu0 %v1299
      %1312 = vmatmul.bf16.gmra.mxu0 %v1295
      %v1313 = vpop.f32.mrf.mxu0
      %v1314 = vadd.f32 %v1291, %v1313
      %v1315 = vpop.f32.mrf.mxu0
      %1316 = vdwg.mxu0
      %1317 = vmatpush.bf16.msra.mxu0 0
      %1318 = vmatpush.bf16.msra.mxu0 0
      %1319 = vmatpush.bf16.msra.mxu0 0
      %1320 = vmatpush.bf16.msra.mxu0 0
      %1321 = vmatpush.bf16.msra.mxu0 0
      %1322 = vmatpush.bf16.msra.mxu0 0
      %1323 = vmatpush.bf16.msra.mxu0 0
      %1324 = vmatpush.bf16.msra.mxu0 %v1302
      %1325 = vmatmul.bf16.gmra.mxu0 %v1295
      %v1326 = vpop.f32.mrf.mxu0
      %v1327 = vadd.f32 %v1291, %v1326
      %v1328 = vpop.f32.mrf.mxu0
      %1329 = vdwg.mxu0
      %v1332 = vrot.slane %v1327, 6
      %vm1333 = vcmask 1041408
      %v1334 = vsel %vm1333, %v1314, %v1332
      %1336 = vst [vmem:[%s359] sm:$0xf] %v1334
      %p1337 = scmp.lt.s32.totalorder %s21, 1
      %s1338 = scalar_select %p1337, %s21, 1
      %s1339 = smul.addr %s1338, 2
      %s1340 = smul.addr %s1339, 2
      %s1341 = scalar_lea.vmem %s10, %s1340
      // Predicated region
      $region61: #{flow_estimator_forward.1} parent=59 // pred_check
        %p1342 = pneg %p254
      $region62: #{flow_estimator_forward.1} parent=59 // pred_check_branch
        %1344 = sbr.rel (%p1342) target = $region64
      $region63: #{flow_estimator_forward.1} parent=59 // pred_region
        _
      $region64: #{flow_estimator_forward.1} parent=59 // pred_fallthru
        _
    $region60: #{flow_estimator_forward.1} parent=5 // pred_fallthru
      _
    %p1345 = scmp.le.s32.totalorder 2, %s16
    // Predicated region
    $region65: #{flow_estimator_forward.1} parent=5 // pred_check
      %p1346 = pneg %p1345
    $region66: #{flow_estimator_forward.1} parent=5 // pred_check_branch
      %1348 = sbr.rel (%p1346) target = $region68
    $region67: #{flow_estimator_forward.1} parent=5 // pred_region
      %s1349 = ssub.s32 %s16, 2
      // Predicated region
      $region69: #{flow_estimator_forward.1} parent=67 // pred_check
        %p1350 = pneg %p260
      $region70: #{flow_estimator_forward.1} parent=67 // pred_check_branch
        %1352 = sbr.rel (%p1350) target = $region72
      $region71: #{flow_estimator_forward.1} parent=67 // pred_region
        %p1353 = scmp.lt.s32.totalorder %s22, 1
        %s1354 = scalar_select %p1353, %s22, 1
        %s1355 = smul.addr %s1354, 2
        %s1356 = smul.addr %s1355, 2
        %s1357 = scalar_lea.vmem %s10, %s1356
      $region72: #{flow_estimator_forward.1} parent=67 // pred_fallthru
        _
    $region68: #{flow_estimator_forward.1} parent=5 // pred_fallthru
      _
  $region6: #{flow_estimator_forward.1} parent=0 // loop_footer
    %s20 = sadd.s32 1, %s16
  $region7: #{flow_estimator_forward.1} parent=0 // loop_footer_branch
    %15 = sbr.rel target = $region3
  $region8: #{flow_estimator_forward.1} parent=0 // loop_exit
    _

</llo_original>
